<compile_context>
chip_gen: v5e
topology: v5e:2x2
jax: 0.10.0
libtpu: 0.0.40
codegen_flags: <defaults>
</compile_context>

<pallas_src>
import math
import functools

import jax
import jax.numpy as jnp
from jax.experimental import pallas as pl
from jax.experimental.pallas import tpu as pltpu


# ----------------------------- config -----------------------------

CONFIG = dict(
    vocab_size=100,
    hidden_size=32,
    num_heads=2,
    num_layers=2,
    intermediate_size=64,
    max_position=16,
    type_vocab_size=2,
    num_labels=3,
    hidden_dropout_prob=0.1,   # identity at inference
)

LANE_PAD = 128                 # lane-dense classifier output width


# ----------------------------- kernel -----------------------------

def _gelu_tanh(y):
    # TODO(synk): exact erf-GELU (HF default) if lax.erf lowering is available;
    #             tanh approximation used here for Mosaic portability.
    return 0.5 * y * (1.0 + jnp.tanh(0.7978845608028654 * (y + 0.044715 * (y * y * y))))


def _ln(y, g, b):
    # BERT LayerNorm, eps = 1e-12, f32.
    mu = jnp.mean(y, axis=-1, keepdims=True)
    var = jnp.mean((y - mu) ** 2, axis=-1, keepdims=True)
    return (y - mu) * jax.lax.rsqrt(var + 1e-12) * g + b


def make_fused_forward_kernel(num_layers, num_heads, head_dim):
    """Whole-model kernel. One grid step == one batch element."""

    def kernel(we_ref, pe_ref, te_ref, emb_g_ref, emb_b_ref, mask_ref,
               qkv_w_ref, qkv_b_ref, ao_w_ref, ao_b_ref,
               attn_g_ref, attn_b_ref, i_w_ref, i_b_ref,
               o_w_ref, o_b_ref, out_g_ref, out_b_ref,
               cls_w_ref, cls_b_ref, o_ref):
        # --- embeddings: sum fused into the LayerNorm (no HBM round-trip) ---
        x = we_ref[0] + pe_ref[...] + te_ref[...]             # (S, H) f32
        x = _ln(x, emb_g_ref[...], emb_b_ref[...])
        mask = mask_ref[0]                                    # (1, S) additive

        S, H = x.shape

        for l in range(num_layers):                           # static unroll (2 layers)
            # --- fused QKV projection: bf16 into the MXU, f32 accumulate.
            #     1/sqrt(head_dim) already folded into the Q weights/bias. ---
            qkv = jnp.dot(x.astype(jnp.bfloat16), qkv_w_ref[l],
                          preferred_element_type=jnp.float32) + qkv_b_ref[l]   # (S, 3H)

            # --- per-head scores/softmax/context from static lane slices of the
            #     QKV slab; contexts re-assembled so the output projection is a
            #     single full-depth K=H matmul. ---
            ctxs = []
            for h in range(num_heads):
                lo = h * head_dim
                q = qkv[:, lo:lo + head_dim]
                k = qkv[:, H + lo:H + lo + head_dim]
                v = qkv[:, 2 * H + lo:2 * H + lo + head_dim]

                s = jax.lax.dot_general(                      # q @ k.T, no transpose op
                    q.astype(jnp.bfloat16), k.astype(jnp.bfloat16),
                    (((1,), (1,)), ((), ())),
                    preferred_element_type=jnp.float32) + mask
                s = s - jnp.max(s, axis=-1, keepdims=True)
                p = jnp.exp(s)
                p = p * pl.reciprocal(jnp.sum(p, axis=-1, keepdims=True), approx=True)

                ctxs.append(jnp.dot(p.astype(jnp.bfloat16), v.astype(jnp.bfloat16),
                                    preferred_element_type=jnp.float32))       # (S, dh)
            ctx = jnp.concatenate(ctxs, axis=-1)              # (S, H)

            attn = jnp.dot(ctx.astype(jnp.bfloat16), ao_w_ref[l],
                           preferred_element_type=jnp.float32) + ao_b_ref[l]
            x = _ln(attn + x, attn_g_ref[l], attn_b_ref[l])

            # --- FFN: bf16 matmuls, f32 GELU ---
            inter = jnp.dot(x.astype(jnp.bfloat16), i_w_ref[l],
                            preferred_element_type=jnp.float32) + i_b_ref[l]
            inter = _gelu_tanh(inter)
            ffn = jnp.dot(inter.astype(jnp.bfloat16), o_w_ref[l],
                          preferred_element_type=jnp.float32) + o_b_ref[l]
            x = _ln(ffn + x, out_g_ref[l], out_b_ref[l])

        # --- CLS pooling + dropout(identity) + classifier, lane-padded output ---
        cls = x[0:1, :]                                       # (1, H)
        o_ref[0] = jnp.dot(cls.astype(jnp.bfloat16), cls_w_ref[...],
                           preferred_element_type=jnp.float32) + cls_b_ref[...]

    return kernel


# ----------------------------- pallas_call builder -----------------------------

@functools.lru_cache(maxsize=None)
def _build_forward_call(B, S, H, I, num_layers, num_heads):
    head_dim = H // num_heads
    kern = make_fused_forward_kernel(num_layers, num_heads, head_dim)

    def rep(shape):
        # grid-invariant block (weights / constants): DMA'd once, never re-fetched.
        # TODO(synk): at real BERT dims add pipeline_mode=pl.Buffered(1) here so the
        # constant weights are not double-buffered (matters for v7x's 64 MiB VMEM).
        return pl.BlockSpec(shape, lambda b, _n=len(shape): (0,) * _n)

    return pl.pallas_call(
        kern,
        out_shape=jax.ShapeDtypeStruct((B, 1, LANE_PAD), jnp.float32),
        grid=(B,),
        in_specs=[
            pl.BlockSpec((1, S, H), lambda b: (b, 0, 0)),      # gathered word embeddings
            rep((S, H)),                                       # position embeddings
            rep((1, H)),                                       # type-0 embedding row
            rep((1, H)), rep((1, H)),                          # embedding LN gamma/beta
            pl.BlockSpec((1, 1, S), lambda b: (b, 0, 0)),      # additive attention mask
            rep((num_layers, H, 3 * H)), rep((num_layers, 1, 3 * H)),   # qkv w/b
            rep((num_layers, H, H)), rep((num_layers, 1, H)),           # attn out w/b
            rep((num_layers, 1, H)), rep((num_layers, 1, H)),           # attn LN
            rep((num_layers, H, I)), rep((num_layers, 1, I)),           # FFN in w/b
            rep((num_layers, I, H)), rep((num_layers, 1, H)),           # FFN out w/b
            rep((num_layers, 1, H)), rep((num_layers, 1, H)),           # out LN
            rep((H, LANE_PAD)), rep((1, LANE_PAD)),                     # classifier
        ],
        out_specs=pl.BlockSpec((1, 1, LANE_PAD), lambda b: (b, 0, 0)),
        compiler_params=pltpu.CompilerParams(
            dimension_semantics=("parallel",),
            vmem_limit_bytes=32 * 1024 * 1024),
    )


# ----------------------------- parameters -----------------------------

def init_params(key, cfg):
    H = cfg["hidden_size"]
    I = cfg["intermediate_size"]
    L = cfg["num_labels"]

    def normal(k, shape, std=0.02):
        return std * jax.random.normal(k, shape, dtype=jnp.float32)

    keys = iter(jax.random.split(key, 8 + 8 * cfg["num_layers"]))
    params = {
        "word_emb": normal(next(keys), (cfg["vocab_size"], H)),
        "pos_emb": normal(next(keys), (cfg["max_position"], H)),
        "type_emb": normal(next(keys), (cfg["type_vocab_size"], H)),
        "emb_ln_g": jnp.ones((H,), jnp.float32),
        "emb_ln_b": jnp.zeros((H,), jnp.float32),
        "layers": [],
    }
    for _ in range(cfg["num_layers"]):
        params["layers"].append({
            "qkv_w": normal(next(keys), (H, 3 * H)),
            "qkv_b": jnp.zeros((3 * H,), jnp.float32),
            "ao_w": normal(next(keys), (H, H)),
            "ao_b": jnp.zeros((H,), jnp.float32),
            "attn_ln_g": jnp.ones((H,), jnp.float32),
            "attn_ln_b": jnp.zeros((H,), jnp.float32),
            "i_w": normal(next(keys), (H, I)),
            "i_b": jnp.zeros((I,), jnp.float32),
            "o_w": normal(next(keys), (I, H)),
            "o_b": jnp.zeros((H,), jnp.float32),
            "out_ln_g": jnp.ones((H,), jnp.float32),
            "out_ln_b": jnp.zeros((H,), jnp.float32),
        })
    # classifier: xavier_normal_ weight, zero bias (as in the PyTorch __init__)
    xavier_std = math.sqrt(2.0 / (H + L))
    params["cls_w"] = xavier_std * jax.random.normal(next(keys), (H, L), dtype=jnp.float32)
    params["cls_b"] = jnp.zeros((L,), jnp.float32)
    return params


def pack_params(params, cfg):
    """Inference layout: bf16 matmul weights (Q scaled by 1/sqrt(dh)), layer
    weights stacked along a leading layer axis, (1,N) f32 biases/LN params,
    lane-padded classifier."""
    H = cfg["hidden_size"]
    L = cfg["num_labels"]
    head_dim = H // cfg["num_heads"]
    scale = 1.0 / math.sqrt(head_dim)
    layers = params["layers"]

    def row(v):
        return v.reshape(1, -1).astype(jnp.float32)

    packed = {
        "word_emb": params["word_emb"],
        "pos_emb": params["pos_emb"],
        "type_row": params["type_emb"][0:1],                   # token_type_ids == 0
        "emb_ln_g": row(params["emb_ln_g"]),
        "emb_ln_b": row(params["emb_ln_b"]),
        # 1/sqrt(head_dim) folded into the Q slice of the QKV projection.
        "qkv_w": jnp.stack([p["qkv_w"].at[:, :H].multiply(scale).astype(jnp.bfloat16)
                            for p in layers]),
        "qkv_b": jnp.stack([row(p["qkv_b"].at[:H].multiply(scale)) for p in layers]),
        "ao_w": jnp.stack([p["ao_w"].astype(jnp.bfloat16) for p in layers]),
        "ao_b": jnp.stack([row(p["ao_b"]) for p in layers]),
        "attn_ln_g": jnp.stack([row(p["attn_ln_g"]) for p in layers]),
        "attn_ln_b": jnp.stack([row(p["attn_ln_b"]) for p in layers]),
        "i_w": jnp.stack([p["i_w"].astype(jnp.bfloat16) for p in layers]),
        "i_b": jnp.stack([row(p["i_b"]) for p in layers]),
        "o_w": jnp.stack([p["o_w"].astype(jnp.bfloat16) for p in layers]),
        "o_b": jnp.stack([row(p["o_b"]) for p in layers]),
        "out_ln_g": jnp.stack([row(p["out_ln_g"]) for p in layers]),
        "out_ln_b": jnp.stack([row(p["out_ln_b"]) for p in layers]),
    }
    w_pad = jnp.zeros((H, LANE_PAD), jnp.float32).at[:, :L].set(params["cls_w"])
    b_pad = jnp.zeros((1, LANE_PAD), jnp.float32).at[:, :L].set(params["cls_b"])
    packed["cls_w_pad"] = w_pad.astype(jnp.bfloat16)
    packed["cls_b_pad"] = b_pad
    return packed


# ----------------------------- forward -----------------------------

def bert_sent_classifier_forward(packed, input_ids, attention_mask, cfg=CONFIG):
    B, S = input_ids.shape
    H = cfg["hidden_size"]
    I = cfg["intermediate_size"]

    # Embedding-table gather stays in plain JAX (data-dependent row gather);
    # everything downstream is one fused Pallas kernel.
    we = jnp.take(packed["word_emb"], input_ids, axis=0)            # (B, S, H)
    pe = packed["pos_emb"][:S]                                      # (S, H)
    # additive attention mask, HF-style: (1 - mask) * -10000, broadcast over query rows
    mask = ((1.0 - attention_mask.astype(jnp.float32)) * -10000.0).reshape(B, 1, S)

    call = _build_forward_call(B, S, H, I, cfg["num_layers"], cfg["num_heads"])
    logits_pad = call(we, pe, packed["type_row"],
                      packed["emb_ln_g"], packed["emb_ln_b"], mask,
                      packed["qkv_w"], packed["qkv_b"],
                      packed["ao_w"], packed["ao_b"],
                      packed["attn_ln_g"], packed["attn_ln_b"],
                      packed["i_w"], packed["i_b"],
                      packed["o_w"], packed["o_b"],
                      packed["out_ln_g"], packed["out_ln_b"],
                      packed["cls_w_pad"], packed["cls_b_pad"])
    return logits_pad[:, 0, :cfg["num_labels"]]


# ----------------------------- main -----------------------------

if __name__ == "__main__":
    key = jax.random.PRNGKey(0)
    k_param, k_ids = jax.random.split(key)

    B, S = 2, 8
    params = init_params(k_param, CONFIG)
    packed = pack_params(params, CONFIG)

    input_ids = jax.random.randint(k_ids, (B, S), 0, CONFIG["vocab_size"], dtype=jnp.int32)
    attention_mask = jnp.ones((B, S), dtype=jnp.int32)
    attention_mask = attention_mask.at[1, 6:].set(0)   # pad last tokens of example 1

    fwd = jax.jit(bert_sent_classifier_forward)
    logits = fwd(packed, input_ids, attention_mask)
    jax.block_until_ready(logits)

    assert logits.shape == (B, CONFIG["num_labels"])
    assert bool(jnp.all(jnp.isfinite(logits)))
    print("KERNEL_OK")
</pallas_src>

<mosaic_0001>
module attributes {stable_mosaic.version = 11 : i64} {
  func.func @kernel(%arg0: i32, %arg1: memref<1x8x32xf32, #tpu.memory_space<vmem>>, %arg2: memref<8x32xf32, #tpu.memory_space<vmem>>, %arg3: memref<1x32xf32, #tpu.memory_space<vmem>>, %arg4: memref<1x32xf32, #tpu.memory_space<vmem>>, %arg5: memref<1x32xf32, #tpu.memory_space<vmem>>, %arg6: memref<1x1x8xf32, #tpu.memory_space<vmem>>, %arg7: memref<2x32x96xbf16, #tpu.memory_space<vmem>>, %arg8: memref<2x1x96xf32, #tpu.memory_space<vmem>>, %arg9: memref<2x32x32xbf16, #tpu.memory_space<vmem>>, %arg10: memref<2x1x32xf32, #tpu.memory_space<vmem>>, %arg11: memref<2x1x32xf32, #tpu.memory_space<vmem>>, %arg12: memref<2x1x32xf32, #tpu.memory_space<vmem>>, %arg13: memref<2x32x64xbf16, #tpu.memory_space<vmem>>, %arg14: memref<2x1x64xf32, #tpu.memory_space<vmem>>, %arg15: memref<2x64x32xbf16, #tpu.memory_space<vmem>>, %arg16: memref<2x1x32xf32, #tpu.memory_space<vmem>>, %arg17: memref<2x1x32xf32, #tpu.memory_space<vmem>>, %arg18: memref<2x1x32xf32, #tpu.memory_space<vmem>>, %arg19: memref<32x128xbf16, #tpu.memory_space<vmem>>, %arg20: memref<1x128xf32, #tpu.memory_space<vmem>>, %arg21: memref<1x1x128xf32, #tpu.memory_space<vmem>>) attributes {dimension_semantics = [#tpu.dimension_semantics<parallel>], iteration_bounds = array<i64: 2>, scalar_prefetch = 0 : i64, scratch_operands = 0 : i64, tpu.core_type = #tpu.core_type<tc>, window_params = [{transform_indices = @transform_0, window_bounds = array<i64: 1, 8, 32>}, {pipeline_mode = #tpu.pipeline_mode<synchronous>, transform_indices = @transform_1, window_bounds = array<i64: 8, 32>}, {pipeline_mode = #tpu.pipeline_mode<synchronous>, transform_indices = @transform_2, window_bounds = array<i64: 1, 32>}, {pipeline_mode = #tpu.pipeline_mode<synchronous>, transform_indices = @transform_3, window_bounds = array<i64: 1, 32>}, {pipeline_mode = #tpu.pipeline_mode<synchronous>, transform_indices = @transform_4, window_bounds = array<i64: 1, 32>}, {transform_indices = @transform_5, window_bounds = array<i64: 1, 1, 8>}, {pipeline_mode = #tpu.pipeline_mode<synchronous>, transform_indices = @transform_6, window_bounds = array<i64: 2, 32, 96>}, {pipeline_mode = #tpu.pipeline_mode<synchronous>, transform_indices = @transform_7, window_bounds = array<i64: 2, 1, 96>}, {pipeline_mode = #tpu.pipeline_mode<synchronous>, transform_indices = @transform_8, window_bounds = array<i64: 2, 32, 32>}, {pipeline_mode = #tpu.pipeline_mode<synchronous>, transform_indices = @transform_9, window_bounds = array<i64: 2, 1, 32>}, {pipeline_mode = #tpu.pipeline_mode<synchronous>, transform_indices = @transform_10, window_bounds = array<i64: 2, 1, 32>}, {pipeline_mode = #tpu.pipeline_mode<synchronous>, transform_indices = @transform_11, window_bounds = array<i64: 2, 1, 32>}, {pipeline_mode = #tpu.pipeline_mode<synchronous>, transform_indices = @transform_12, window_bounds = array<i64: 2, 32, 64>}, {pipeline_mode = #tpu.pipeline_mode<synchronous>, transform_indices = @transform_13, window_bounds = array<i64: 2, 1, 64>}, {pipeline_mode = #tpu.pipeline_mode<synchronous>, transform_indices = @transform_14, window_bounds = array<i64: 2, 64, 32>}, {pipeline_mode = #tpu.pipeline_mode<synchronous>, transform_indices = @transform_15, window_bounds = array<i64: 2, 1, 32>}, {pipeline_mode = #tpu.pipeline_mode<synchronous>, transform_indices = @transform_16, window_bounds = array<i64: 2, 1, 32>}, {pipeline_mode = #tpu.pipeline_mode<synchronous>, transform_indices = @transform_17, window_bounds = array<i64: 2, 1, 32>}, {pipeline_mode = #tpu.pipeline_mode<synchronous>, transform_indices = @transform_18, window_bounds = array<i64: 32, 128>}, {pipeline_mode = #tpu.pipeline_mode<synchronous>, transform_indices = @transform_19, window_bounds = array<i64: 1, 128>}, {transform_indices = @transform_20, window_bounds = array<i64: 1, 1, 128>}]} {
    %c0 = arith.constant 0 : index
    %c0_0 = arith.constant 0 : index
    %c0_1 = arith.constant 0 : index
    %0 = vector.load %arg1[%c0, %c0_0, %c0_1] : memref<1x8x32xf32, #tpu.memory_space<vmem>>, vector<1x8x32xf32>
    %1 = vector.shape_cast %0 : vector<1x8x32xf32> to vector<8x32xf32>
    %c0_2 = arith.constant 0 : index
    %c0_3 = arith.constant 0 : index
    %2 = vector.load %arg2[%c0_2, %c0_3] : memref<8x32xf32, #tpu.memory_space<vmem>>, vector<8x32xf32>
    %3 = arith.addf %1, %2 : vector<8x32xf32>
    %c0_4 = arith.constant 0 : index
    %c0_5 = arith.constant 0 : index
    %4 = vector.load %arg3[%c0_4, %c0_5] : memref<1x32xf32, #tpu.memory_space<vmem>>, vector<1x32xf32>
    %5 = vector.broadcast %4 : vector<1x32xf32> to vector<8x32xf32>
    %6 = arith.addf %3, %5 : vector<8x32xf32>
    %c0_6 = arith.constant 0 : index
    %c0_7 = arith.constant 0 : index
    %7 = vector.load %arg4[%c0_6, %c0_7] : memref<1x32xf32, #tpu.memory_space<vmem>>, vector<1x32xf32>
    %c0_8 = arith.constant 0 : index
    %c0_9 = arith.constant 0 : index
    %8 = vector.load %arg5[%c0_8, %c0_9] : memref<1x32xf32, #tpu.memory_space<vmem>>, vector<1x32xf32>
    %cst = arith.constant dense<0.000000e+00> : vector<8xf32>
    %9 = vector.multi_reduction <add>, %6, %cst [1] : vector<8x32xf32> to vector<8xf32>
    %10 = vector.shape_cast %9 : vector<8xf32> to vector<8x1xf32>
    %cst_10 = arith.constant 3.200000e+01 : f32
    %11 = vector.broadcast %cst_10 : f32 to vector<8x1xf32>
    %12 = arith.divf %10, %11 : vector<8x1xf32>
    %13 = vector.broadcast %12 : vector<8x1xf32> to vector<8x32xf32>
    %14 = arith.subf %6, %13 : vector<8x32xf32>
    %15 = arith.mulf %14, %14 : vector<8x32xf32>
    %cst_11 = arith.constant dense<0.000000e+00> : vector<8xf32>
    %16 = vector.multi_reduction <add>, %15, %cst_11 [1] : vector<8x32xf32> to vector<8xf32>
    %17 = vector.shape_cast %16 : vector<8xf32> to vector<8x1xf32>
    %cst_12 = arith.constant 3.200000e+01 : f32
    %18 = vector.broadcast %cst_12 : f32 to vector<8x1xf32>
    %19 = arith.divf %17, %18 : vector<8x1xf32>
    %20 = vector.broadcast %12 : vector<8x1xf32> to vector<8x32xf32>
    %21 = arith.subf %6, %20 : vector<8x32xf32>
    %cst_13 = arith.constant 9.99999996E-13 : f32
    %22 = vector.broadcast %cst_13 : f32 to vector<8x1xf32>
    %23 = arith.addf %19, %22 : vector<8x1xf32>
    %24 = math.rsqrt %23 : vector<8x1xf32>
    %25 = vector.broadcast %24 : vector<8x1xf32> to vector<8x32xf32>
    %26 = arith.mulf %21, %25 : vector<8x32xf32>
    %27 = vector.broadcast %7 : vector<1x32xf32> to vector<8x32xf32>
    %28 = arith.mulf %26, %27 : vector<8x32xf32>
    %29 = vector.broadcast %8 : vector<1x32xf32> to vector<8x32xf32>
    %30 = arith.addf %28, %29 : vector<8x32xf32>
    %c0_14 = arith.constant 0 : index
    %c0_15 = arith.constant 0 : index
    %c0_16 = arith.constant 0 : index
    %31 = vector.load %arg6[%c0_14, %c0_15, %c0_16] : memref<1x1x8xf32, #tpu.memory_space<vmem>>, vector<1x1x8xf32>
    %32 = vector.shape_cast %31 : vector<1x1x8xf32> to vector<1x8xf32>
    %33 = arith.truncf %30 : vector<8x32xf32> to vector<8x32xbf16>
    %c0_17 = arith.constant 0 : index
    %c0_18 = arith.constant 0 : index
    %c0_19 = arith.constant 0 : index
    %34 = vector.load %arg7[%c0_17, %c0_18, %c0_19] : memref<2x32x96xbf16, #tpu.memory_space<vmem>>, vector<1x32x96xbf16>
    %35 = vector.shape_cast %34 : vector<1x32x96xbf16> to vector<32x96xbf16>
    %cst_20 = arith.constant dense<0.000000e+00> : vector<8x96xf32>
    %36 = tpu.matmul %33, %35, %cst_20 {dimension_numbers = #tpu.dot_dimension_numbers<[1], [0], [0], [1], [0, 0, 1, 1], [], []>} : vector<8x32xbf16>, vector<32x96xbf16>, vector<8x96xf32> -> vector<8x96xf32>
    %c0_21 = arith.constant 0 : index
    %c0_22 = arith.constant 0 : index
    %c0_23 = arith.constant 0 : index
    %37 = vector.load %arg8[%c0_21, %c0_22, %c0_23] : memref<2x1x96xf32, #tpu.memory_space<vmem>>, vector<1x1x96xf32>
    %38 = vector.shape_cast %37 : vector<1x1x96xf32> to vector<1x96xf32>
    %39 = vector.broadcast %38 : vector<1x96xf32> to vector<8x96xf32>
    %40 = arith.addf %36, %39 : vector<8x96xf32>
    %41 = vector.extract_strided_slice %40 {offsets = [0, 0], sizes = [8, 16], strides = [1, 1]} : vector<8x96xf32> to vector<8x16xf32>
    %42 = vector.extract_strided_slice %40 {offsets = [0, 32], sizes = [8, 16], strides = [1, 1]} : vector<8x96xf32> to vector<8x16xf32>
    %43 = vector.extract_strided_slice %40 {offsets = [0, 64], sizes = [8, 16], strides = [1, 1]} : vector<8x96xf32> to vector<8x16xf32>
    %44 = arith.truncf %41 : vector<8x16xf32> to vector<8x16xbf16>
    %45 = arith.truncf %42 : vector<8x16xf32> to vector<8x16xbf16>
    %cst_24 = arith.constant dense<0.000000e+00> : vector<8x8xf32>
    %46 = tpu.matmul %44, %45, %cst_24 {dimension_numbers = #tpu.dot_dimension_numbers<[1], [1], [0], [0], [0, 0, 1, 0], [], []>} : vector<8x16xbf16>, vector<8x16xbf16>, vector<8x8xf32> -> vector<8x8xf32>
    %47 = vector.broadcast %32 : vector<1x8xf32> to vector<8x8xf32>
    %48 = arith.addf %46, %47 : vector<8x8xf32>
    %cst_25 = arith.constant dense<0xFF800000> : vector<8xf32>
    %49 = vector.multi_reduction <maximumf>, %48, %cst_25 [1] : vector<8x8xf32> to vector<8xf32>
    %50 = vector.shape_cast %49 : vector<8xf32> to vector<8x1xf32>
    %51 = vector.broadcast %50 : vector<8x1xf32> to vector<8x8xf32>
    %52 = arith.subf %48, %51 : vector<8x8xf32>
    %53 = math.exp %52 : vector<8x8xf32>
    %cst_26 = arith.constant dense<0.000000e+00> : vector<8xf32>
    %54 = vector.multi_reduction <add>, %53, %cst_26 [1] : vector<8x8xf32> to vector<8xf32>
    %55 = vector.shape_cast %54 : vector<8xf32> to vector<8x1xf32>
    %56 = tpu.reciprocal %55 {approx = true} : vector<8x1xf32> -> vector<8x1xf32>
    %57 = vector.broadcast %56 : vector<8x1xf32> to vector<8x8xf32>
    %58 = arith.mulf %53, %57 : vector<8x8xf32>
    %59 = arith.truncf %58 : vector<8x8xf32> to vector<8x8xbf16>
    %60 = arith.truncf %43 : vector<8x16xf32> to vector<8x16xbf16>
    %cst_27 = arith.constant dense<0.000000e+00> : vector<8x16xf32>
    %61 = tpu.matmul %59, %60, %cst_27 {dimension_numbers = #tpu.dot_dimension_numbers<[1], [0], [0], [1], [0, 0, 1, 1], [], []>} : vector<8x8xbf16>, vector<8x16xbf16>, vector<8x16xf32> -> vector<8x16xf32>
    %62 = vector.extract_strided_slice %40 {offsets = [0, 16], sizes = [8, 16], strides = [1, 1]} : vector<8x96xf32> to vector<8x16xf32>
    %63 = vector.extract_strided_slice %40 {offsets = [0, 48], sizes = [8, 16], strides = [1, 1]} : vector<8x96xf32> to vector<8x16xf32>
    %64 = vector.extract_strided_slice %40 {offsets = [0, 80], sizes = [8, 16], strides = [1, 1]} : vector<8x96xf32> to vector<8x16xf32>
    %65 = arith.truncf %62 : vector<8x16xf32> to vector<8x16xbf16>
    %66 = arith.truncf %63 : vector<8x16xf32> to vector<8x16xbf16>
    %cst_28 = arith.constant dense<0.000000e+00> : vector<8x8xf32>
    %67 = tpu.matmul %65, %66, %cst_28 {dimension_numbers = #tpu.dot_dimension_numbers<[1], [1], [0], [0], [0, 0, 1, 0], [], []>} : vector<8x16xbf16>, vector<8x16xbf16>, vector<8x8xf32> -> vector<8x8xf32>
    %68 = vector.broadcast %32 : vector<1x8xf32> to vector<8x8xf32>
    %69 = arith.addf %67, %68 : vector<8x8xf32>
    %cst_29 = arith.constant dense<0xFF800000> : vector<8xf32>
    %70 = vector.multi_reduction <maximumf>, %69, %cst_29 [1] : vector<8x8xf32> to vector<8xf32>
    %71 = vector.shape_cast %70 : vector<8xf32> to vector<8x1xf32>
    %72 = vector.broadcast %71 : vector<8x1xf32> to vector<8x8xf32>
    %73 = arith.subf %69, %72 : vector<8x8xf32>
    %74 = math.exp %73 : vector<8x8xf32>
    %cst_30 = arith.constant dense<0.000000e+00> : vector<8xf32>
    %75 = vector.multi_reduction <add>, %74, %cst_30 [1] : vector<8x8xf32> to vector<8xf32>
    %76 = vector.shape_cast %75 : vector<8xf32> to vector<8x1xf32>
    %77 = tpu.reciprocal %76 {approx = true} : vector<8x1xf32> -> vector<8x1xf32>
    %78 = vector.broadcast %77 : vector<8x1xf32> to vector<8x8xf32>
    %79 = arith.mulf %74, %78 : vector<8x8xf32>
    %80 = arith.truncf %79 : vector<8x8xf32> to vector<8x8xbf16>
    %81 = arith.truncf %64 : vector<8x16xf32> to vector<8x16xbf16>
    %cst_31 = arith.constant dense<0.000000e+00> : vector<8x16xf32>
    %82 = tpu.matmul %80, %81, %cst_31 {dimension_numbers = #tpu.dot_dimension_numbers<[1], [0], [0], [1], [0, 0, 1, 1], [], []>} : vector<8x8xbf16>, vector<8x16xbf16>, vector<8x16xf32> -> vector<8x16xf32>
    %83 = tpu.concatenate %61, %82 in 1 : vector<8x16xf32>, vector<8x16xf32> -> vector<8x32xf32>
    %84 = arith.truncf %83 : vector<8x32xf32> to vector<8x32xbf16>
    %c0_32 = arith.constant 0 : index
    %c0_33 = arith.constant 0 : index
    %c0_34 = arith.constant 0 : index
    %85 = vector.load %arg9[%c0_32, %c0_33, %c0_34] : memref<2x32x32xbf16, #tpu.memory_space<vmem>>, vector<1x32x32xbf16>
    %86 = vector.shape_cast %85 : vector<1x32x32xbf16> to vector<32x32xbf16>
    %cst_35 = arith.constant dense<0.000000e+00> : vector<8x32xf32>
    %87 = tpu.matmul %84, %86, %cst_35 {dimension_numbers = #tpu.dot_dimension_numbers<[1], [0], [0], [1], [0, 0, 1, 1], [], []>} : vector<8x32xbf16>, vector<32x32xbf16>, vector<8x32xf32> -> vector<8x32xf32>
    %c0_36 = arith.constant 0 : index
    %c0_37 = arith.constant 0 : index
    %c0_38 = arith.constant 0 : index
    %88 = vector.load %arg10[%c0_36, %c0_37, %c0_38] : memref<2x1x32xf32, #tpu.memory_space<vmem>>, vector<1x1x32xf32>
    %89 = vector.shape_cast %88 : vector<1x1x32xf32> to vector<1x32xf32>
    %90 = vector.broadcast %89 : vector<1x32xf32> to vector<8x32xf32>
    %91 = arith.addf %87, %90 : vector<8x32xf32>
    %92 = arith.addf %91, %30 : vector<8x32xf32>
    %c0_39 = arith.constant 0 : index
    %c0_40 = arith.constant 0 : index
    %c0_41 = arith.constant 0 : index
    %93 = vector.load %arg11[%c0_39, %c0_40, %c0_41] : memref<2x1x32xf32, #tpu.memory_space<vmem>>, vector<1x1x32xf32>
    %94 = vector.shape_cast %93 : vector<1x1x32xf32> to vector<1x32xf32>
    %c0_42 = arith.constant 0 : index
    %c0_43 = arith.constant 0 : index
    %c0_44 = arith.constant 0 : index
    %95 = vector.load %arg12[%c0_42, %c0_43, %c0_44] : memref<2x1x32xf32, #tpu.memory_space<vmem>>, vector<1x1x32xf32>
    %96 = vector.shape_cast %95 : vector<1x1x32xf32> to vector<1x32xf32>
    %cst_45 = arith.constant dense<0.000000e+00> : vector<8xf32>
    %97 = vector.multi_reduction <add>, %92, %cst_45 [1] : vector<8x32xf32> to vector<8xf32>
    %98 = vector.shape_cast %97 : vector<8xf32> to vector<8x1xf32>
    %cst_46 = arith.constant 3.200000e+01 : f32
    %99 = vector.broadcast %cst_46 : f32 to vector<8x1xf32>
    %100 = arith.divf %98, %99 : vector<8x1xf32>
    %101 = vector.broadcast %100 : vector<8x1xf32> to vector<8x32xf32>
    %102 = arith.subf %92, %101 : vector<8x32xf32>
    %103 = arith.mulf %102, %102 : vector<8x32xf32>
    %cst_47 = arith.constant dense<0.000000e+00> : vector<8xf32>
    %104 = vector.multi_reduction <add>, %103, %cst_47 [1] : vector<8x32xf32> to vector<8xf32>
    %105 = vector.shape_cast %104 : vector<8xf32> to vector<8x1xf32>
    %cst_48 = arith.constant 3.200000e+01 : f32
    %106 = vector.broadcast %cst_48 : f32 to vector<8x1xf32>
    %107 = arith.divf %105, %106 : vector<8x1xf32>
    %108 = vector.broadcast %100 : vector<8x1xf32> to vector<8x32xf32>
    %109 = arith.subf %92, %108 : vector<8x32xf32>
    %cst_49 = arith.constant 9.99999996E-13 : f32
    %110 = vector.broadcast %cst_49 : f32 to vector<8x1xf32>
    %111 = arith.addf %107, %110 : vector<8x1xf32>
    %112 = math.rsqrt %111 : vector<8x1xf32>
    %113 = vector.broadcast %112 : vector<8x1xf32> to vector<8x32xf32>
    %114 = arith.mulf %109, %113 : vector<8x32xf32>
    %115 = vector.broadcast %94 : vector<1x32xf32> to vector<8x32xf32>
    %116 = arith.mulf %114, %115 : vector<8x32xf32>
    %117 = vector.broadcast %96 : vector<1x32xf32> to vector<8x32xf32>
    %118 = arith.addf %116, %117 : vector<8x32xf32>
    %119 = arith.truncf %118 : vector<8x32xf32> to vector<8x32xbf16>
    %c0_50 = arith.constant 0 : index
    %c0_51 = arith.constant 0 : index
    %c0_52 = arith.constant 0 : index
    %120 = vector.load %arg13[%c0_50, %c0_51, %c0_52] : memref<2x32x64xbf16, #tpu.memory_space<vmem>>, vector<1x32x64xbf16>
    %121 = vector.shape_cast %120 : vector<1x32x64xbf16> to vector<32x64xbf16>
    %cst_53 = arith.constant dense<0.000000e+00> : vector<8x64xf32>
    %122 = tpu.matmul %119, %121, %cst_53 {dimension_numbers = #tpu.dot_dimension_numbers<[1], [0], [0], [1], [0, 0, 1, 1], [], []>} : vector<8x32xbf16>, vector<32x64xbf16>, vector<8x64xf32> -> vector<8x64xf32>
    %c0_54 = arith.constant 0 : index
    %c0_55 = arith.constant 0 : index
    %c0_56 = arith.constant 0 : index
    %123 = vector.load %arg14[%c0_54, %c0_55, %c0_56] : memref<2x1x64xf32, #tpu.memory_space<vmem>>, vector<1x1x64xf32>
    %124 = vector.shape_cast %123 : vector<1x1x64xf32> to vector<1x64xf32>
    %125 = vector.broadcast %124 : vector<1x64xf32> to vector<8x64xf32>
    %126 = arith.addf %122, %125 : vector<8x64xf32>
    %cst_57 = arith.constant 5.000000e-01 : f32
    %127 = vector.broadcast %cst_57 : f32 to vector<8x64xf32>
    %128 = arith.mulf %127, %126 : vector<8x64xf32>
    %129 = arith.mulf %126, %126 : vector<8x64xf32>
    %130 = arith.mulf %129, %126 : vector<8x64xf32>
    %cst_58 = arith.constant 4.471500e-02 : f32
    %131 = vector.broadcast %cst_58 : f32 to vector<8x64xf32>
    %132 = arith.mulf %131, %130 : vector<8x64xf32>
    %133 = arith.addf %126, %132 : vector<8x64xf32>
    %cst_59 = arith.constant 0.797884583 : f32
    %134 = vector.broadcast %cst_59 : f32 to vector<8x64xf32>
    %135 = arith.mulf %134, %133 : vector<8x64xf32>
    %136 = math.tanh %135 : vector<8x64xf32>
    %cst_60 = arith.constant 1.000000e+00 : f32
    %137 = vector.broadcast %cst_60 : f32 to vector<8x64xf32>
    %138 = arith.addf %137, %136 : vector<8x64xf32>
    %139 = arith.mulf %128, %138 : vector<8x64xf32>
    %140 = arith.truncf %139 : vector<8x64xf32> to vector<8x64xbf16>
    %c0_61 = arith.constant 0 : index
    %c0_62 = arith.constant 0 : index
    %c0_63 = arith.constant 0 : index
    %141 = vector.load %arg15[%c0_61, %c0_62, %c0_63] : memref<2x64x32xbf16, #tpu.memory_space<vmem>>, vector<1x64x32xbf16>
    %142 = vector.shape_cast %141 : vector<1x64x32xbf16> to vector<64x32xbf16>
    %cst_64 = arith.constant dense<0.000000e+00> : vector<8x32xf32>
    %143 = tpu.matmul %140, %142, %cst_64 {dimension_numbers = #tpu.dot_dimension_numbers<[1], [0], [0], [1], [0, 0, 1, 1], [], []>} : vector<8x64xbf16>, vector<64x32xbf16>, vector<8x32xf32> -> vector<8x32xf32>
    %c0_65 = arith.constant 0 : index
    %c0_66 = arith.constant 0 : index
    %c0_67 = arith.constant 0 : index
    %144 = vector.load %arg16[%c0_65, %c0_66, %c0_67] : memref<2x1x32xf32, #tpu.memory_space<vmem>>, vector<1x1x32xf32>
    %145 = vector.shape_cast %144 : vector<1x1x32xf32> to vector<1x32xf32>
    %146 = vector.broadcast %145 : vector<1x32xf32> to vector<8x32xf32>
    %147 = arith.addf %143, %146 : vector<8x32xf32>
    %148 = arith.addf %147, %118 : vector<8x32xf32>
    %c0_68 = arith.constant 0 : index
    %c0_69 = arith.constant 0 : index
    %c0_70 = arith.constant 0 : index
    %149 = vector.load %arg17[%c0_68, %c0_69, %c0_70] : memref<2x1x32xf32, #tpu.memory_space<vmem>>, vector<1x1x32xf32>
    %150 = vector.shape_cast %149 : vector<1x1x32xf32> to vector<1x32xf32>
    %c0_71 = arith.constant 0 : index
    %c0_72 = arith.constant 0 : index
    %c0_73 = arith.constant 0 : index
    %151 = vector.load %arg18[%c0_71, %c0_72, %c0_73] : memref<2x1x32xf32, #tpu.memory_space<vmem>>, vector<1x1x32xf32>
    %152 = vector.shape_cast %151 : vector<1x1x32xf32> to vector<1x32xf32>
    %cst_74 = arith.constant dense<0.000000e+00> : vector<8xf32>
    %153 = vector.multi_reduction <add>, %148, %cst_74 [1] : vector<8x32xf32> to vector<8xf32>
    %154 = vector.shape_cast %153 : vector<8xf32> to vector<8x1xf32>
    %cst_75 = arith.constant 3.200000e+01 : f32
    %155 = vector.broadcast %cst_75 : f32 to vector<8x1xf32>
    %156 = arith.divf %154, %155 : vector<8x1xf32>
    %157 = vector.broadcast %156 : vector<8x1xf32> to vector<8x32xf32>
    %158 = arith.subf %148, %157 : vector<8x32xf32>
    %159 = arith.mulf %158, %158 : vector<8x32xf32>
    %cst_76 = arith.constant dense<0.000000e+00> : vector<8xf32>
    %160 = vector.multi_reduction <add>, %159, %cst_76 [1] : vector<8x32xf32> to vector<8xf32>
    %161 = vector.shape_cast %160 : vector<8xf32> to vector<8x1xf32>
    %cst_77 = arith.constant 3.200000e+01 : f32
    %162 = vector.broadcast %cst_77 : f32 to vector<8x1xf32>
    %163 = arith.divf %161, %162 : vector<8x1xf32>
    %164 = vector.broadcast %156 : vector<8x1xf32> to vector<8x32xf32>
    %165 = arith.subf %148, %164 : vector<8x32xf32>
    %cst_78 = arith.constant 9.99999996E-13 : f32
    %166 = vector.broadcast %cst_78 : f32 to vector<8x1xf32>
    %167 = arith.addf %163, %166 : vector<8x1xf32>
    %168 = math.rsqrt %167 : vector<8x1xf32>
    %169 = vector.broadcast %168 : vector<8x1xf32> to vector<8x32xf32>
    %170 = arith.mulf %165, %169 : vector<8x32xf32>
    %171 = vector.broadcast %150 : vector<1x32xf32> to vector<8x32xf32>
    %172 = arith.mulf %170, %171 : vector<8x32xf32>
    %173 = vector.broadcast %152 : vector<1x32xf32> to vector<8x32xf32>
    %174 = arith.addf %172, %173 : vector<8x32xf32>
    %175 = arith.truncf %174 : vector<8x32xf32> to vector<8x32xbf16>
    %c1 = arith.constant 1 : index
    %c0_79 = arith.constant 0 : index
    %c0_80 = arith.constant 0 : index
    %176 = vector.load %arg7[%c1, %c0_79, %c0_80] : memref<2x32x96xbf16, #tpu.memory_space<vmem>>, vector<1x32x96xbf16>
    %177 = vector.shape_cast %176 : vector<1x32x96xbf16> to vector<32x96xbf16>
    %cst_81 = arith.constant dense<0.000000e+00> : vector<8x96xf32>
    %178 = tpu.matmul %175, %177, %cst_81 {dimension_numbers = #tpu.dot_dimension_numbers<[1], [0], [0], [1], [0, 0, 1, 1], [], []>} : vector<8x32xbf16>, vector<32x96xbf16>, vector<8x96xf32> -> vector<8x96xf32>
    %c1_82 = arith.constant 1 : index
    %c0_83 = arith.constant 0 : index
    %c0_84 = arith.constant 0 : index
    %179 = vector.load %arg8[%c1_82, %c0_83, %c0_84] : memref<2x1x96xf32, #tpu.memory_space<vmem>>, vector<1x1x96xf32>
    %180 = vector.shape_cast %179 : vector<1x1x96xf32> to vector<1x96xf32>
    %181 = vector.broadcast %180 : vector<1x96xf32> to vector<8x96xf32>
    %182 = arith.addf %178, %181 : vector<8x96xf32>
    %183 = vector.extract_strided_slice %182 {offsets = [0, 0], sizes = [8, 16], strides = [1, 1]} : vector<8x96xf32> to vector<8x16xf32>
    %184 = vector.extract_strided_slice %182 {offsets = [0, 32], sizes = [8, 16], strides = [1, 1]} : vector<8x96xf32> to vector<8x16xf32>
    %185 = vector.extract_strided_slice %182 {offsets = [0, 64], sizes = [8, 16], strides = [1, 1]} : vector<8x96xf32> to vector<8x16xf32>
    %186 = arith.truncf %183 : vector<8x16xf32> to vector<8x16xbf16>
    %187 = arith.truncf %184 : vector<8x16xf32> to vector<8x16xbf16>
    %cst_85 = arith.constant dense<0.000000e+00> : vector<8x8xf32>
    %188 = tpu.matmul %186, %187, %cst_85 {dimension_numbers = #tpu.dot_dimension_numbers<[1], [1], [0], [0], [0, 0, 1, 0], [], []>} : vector<8x16xbf16>, vector<8x16xbf16>, vector<8x8xf32> -> vector<8x8xf32>
    %189 = vector.broadcast %32 : vector<1x8xf32> to vector<8x8xf32>
    %190 = arith.addf %188, %189 : vector<8x8xf32>
    %cst_86 = arith.constant dense<0xFF800000> : vector<8xf32>
    %191 = vector.multi_reduction <maximumf>, %190, %cst_86 [1] : vector<8x8xf32> to vector<8xf32>
    %192 = vector.shape_cast %191 : vector<8xf32> to vector<8x1xf32>
    %193 = vector.broadcast %192 : vector<8x1xf32> to vector<8x8xf32>
    %194 = arith.subf %190, %193 : vector<8x8xf32>
    %195 = math.exp %194 : vector<8x8xf32>
    %cst_87 = arith.constant dense<0.000000e+00> : vector<8xf32>
    %196 = vector.multi_reduction <add>, %195, %cst_87 [1] : vector<8x8xf32> to vector<8xf32>
    %197 = vector.shape_cast %196 : vector<8xf32> to vector<8x1xf32>
    %198 = tpu.reciprocal %197 {approx = true} : vector<8x1xf32> -> vector<8x1xf32>
    %199 = vector.broadcast %198 : vector<8x1xf32> to vector<8x8xf32>
    %200 = arith.mulf %195, %199 : vector<8x8xf32>
    %201 = arith.truncf %200 : vector<8x8xf32> to vector<8x8xbf16>
    %202 = arith.truncf %185 : vector<8x16xf32> to vector<8x16xbf16>
    %cst_88 = arith.constant dense<0.000000e+00> : vector<8x16xf32>
    %203 = tpu.matmul %201, %202, %cst_88 {dimension_numbers = #tpu.dot_dimension_numbers<[1], [0], [0], [1], [0, 0, 1, 1], [], []>} : vector<8x8xbf16>, vector<8x16xbf16>, vector<8x16xf32> -> vector<8x16xf32>
    %204 = vector.extract_strided_slice %182 {offsets = [0, 16], sizes = [8, 16], strides = [1, 1]} : vector<8x96xf32> to vector<8x16xf32>
    %205 = vector.extract_strided_slice %182 {offsets = [0, 48], sizes = [8, 16], strides = [1, 1]} : vector<8x96xf32> to vector<8x16xf32>
    %206 = vector.extract_strided_slice %182 {offsets = [0, 80], sizes = [8, 16], strides = [1, 1]} : vector<8x96xf32> to vector<8x16xf32>
    %207 = arith.truncf %204 : vector<8x16xf32> to vector<8x16xbf16>
    %208 = arith.truncf %205 : vector<8x16xf32> to vector<8x16xbf16>
    %cst_89 = arith.constant dense<0.000000e+00> : vector<8x8xf32>
    %209 = tpu.matmul %207, %208, %cst_89 {dimension_numbers = #tpu.dot_dimension_numbers<[1], [1], [0], [0], [0, 0, 1, 0], [], []>} : vector<8x16xbf16>, vector<8x16xbf16>, vector<8x8xf32> -> vector<8x8xf32>
    %210 = vector.broadcast %32 : vector<1x8xf32> to vector<8x8xf32>
    %211 = arith.addf %209, %210 : vector<8x8xf32>
    %cst_90 = arith.constant dense<0xFF800000> : vector<8xf32>
    %212 = vector.multi_reduction <maximumf>, %211, %cst_90 [1] : vector<8x8xf32> to vector<8xf32>
    %213 = vector.shape_cast %212 : vector<8xf32> to vector<8x1xf32>
    %214 = vector.broadcast %213 : vector<8x1xf32> to vector<8x8xf32>
    %215 = arith.subf %211, %214 : vector<8x8xf32>
    %216 = math.exp %215 : vector<8x8xf32>
    %cst_91 = arith.constant dense<0.000000e+00> : vector<8xf32>
    %217 = vector.multi_reduction <add>, %216, %cst_91 [1] : vector<8x8xf32> to vector<8xf32>
    %218 = vector.shape_cast %217 : vector<8xf32> to vector<8x1xf32>
    %219 = tpu.reciprocal %218 {approx = true} : vector<8x1xf32> -> vector<8x1xf32>
    %220 = vector.broadcast %219 : vector<8x1xf32> to vector<8x8xf32>
    %221 = arith.mulf %216, %220 : vector<8x8xf32>
    %222 = arith.truncf %221 : vector<8x8xf32> to vector<8x8xbf16>
    %223 = arith.truncf %206 : vector<8x16xf32> to vector<8x16xbf16>
    %cst_92 = arith.constant dense<0.000000e+00> : vector<8x16xf32>
    %224 = tpu.matmul %222, %223, %cst_92 {dimension_numbers = #tpu.dot_dimension_numbers<[1], [0], [0], [1], [0, 0, 1, 1], [], []>} : vector<8x8xbf16>, vector<8x16xbf16>, vector<8x16xf32> -> vector<8x16xf32>
    %225 = tpu.concatenate %203, %224 in 1 : vector<8x16xf32>, vector<8x16xf32> -> vector<8x32xf32>
    %226 = arith.truncf %225 : vector<8x32xf32> to vector<8x32xbf16>
    %c1_93 = arith.constant 1 : index
    %c0_94 = arith.constant 0 : index
    %c0_95 = arith.constant 0 : index
    %227 = vector.load %arg9[%c1_93, %c0_94, %c0_95] : memref<2x32x32xbf16, #tpu.memory_space<vmem>>, vector<1x32x32xbf16>
    %228 = vector.shape_cast %227 : vector<1x32x32xbf16> to vector<32x32xbf16>
    %cst_96 = arith.constant dense<0.000000e+00> : vector<8x32xf32>
    %229 = tpu.matmul %226, %228, %cst_96 {dimension_numbers = #tpu.dot_dimension_numbers<[1], [0], [0], [1], [0, 0, 1, 1], [], []>} : vector<8x32xbf16>, vector<32x32xbf16>, vector<8x32xf32> -> vector<8x32xf32>
    %c1_97 = arith.constant 1 : index
    %c0_98 = arith.constant 0 : index
    %c0_99 = arith.constant 0 : index
    %230 = vector.load %arg10[%c1_97, %c0_98, %c0_99] : memref<2x1x32xf32, #tpu.memory_space<vmem>>, vector<1x1x32xf32>
    %231 = vector.shape_cast %230 : vector<1x1x32xf32> to vector<1x32xf32>
    %232 = vector.broadcast %231 : vector<1x32xf32> to vector<8x32xf32>
    %233 = arith.addf %229, %232 : vector<8x32xf32>
    %234 = arith.addf %233, %174 : vector<8x32xf32>
    %c1_100 = arith.constant 1 : index
    %c0_101 = arith.constant 0 : index
    %c0_102 = arith.constant 0 : index
    %235 = vector.load %arg11[%c1_100, %c0_101, %c0_102] : memref<2x1x32xf32, #tpu.memory_space<vmem>>, vector<1x1x32xf32>
    %236 = vector.shape_cast %235 : vector<1x1x32xf32> to vector<1x32xf32>
    %c1_103 = arith.constant 1 : index
    %c0_104 = arith.constant 0 : index
    %c0_105 = arith.constant 0 : index
    %237 = vector.load %arg12[%c1_103, %c0_104, %c0_105] : memref<2x1x32xf32, #tpu.memory_space<vmem>>, vector<1x1x32xf32>
    %238 = vector.shape_cast %237 : vector<1x1x32xf32> to vector<1x32xf32>
    %cst_106 = arith.constant dense<0.000000e+00> : vector<8xf32>
    %239 = vector.multi_reduction <add>, %234, %cst_106 [1] : vector<8x32xf32> to vector<8xf32>
    %240 = vector.shape_cast %239 : vector<8xf32> to vector<8x1xf32>
    %cst_107 = arith.constant 3.200000e+01 : f32
    %241 = vector.broadcast %cst_107 : f32 to vector<8x1xf32>
    %242 = arith.divf %240, %241 : vector<8x1xf32>
    %243 = vector.broadcast %242 : vector<8x1xf32> to vector<8x32xf32>
    %244 = arith.subf %234, %243 : vector<8x32xf32>
    %245 = arith.mulf %244, %244 : vector<8x32xf32>
    %cst_108 = arith.constant dense<0.000000e+00> : vector<8xf32>
    %246 = vector.multi_reduction <add>, %245, %cst_108 [1] : vector<8x32xf32> to vector<8xf32>
    %247 = vector.shape_cast %246 : vector<8xf32> to vector<8x1xf32>
    %cst_109 = arith.constant 3.200000e+01 : f32
    %248 = vector.broadcast %cst_109 : f32 to vector<8x1xf32>
    %249 = arith.divf %247, %248 : vector<8x1xf32>
    %250 = vector.broadcast %242 : vector<8x1xf32> to vector<8x32xf32>
    %251 = arith.subf %234, %250 : vector<8x32xf32>
    %cst_110 = arith.constant 9.99999996E-13 : f32
    %252 = vector.broadcast %cst_110 : f32 to vector<8x1xf32>
    %253 = arith.addf %249, %252 : vector<8x1xf32>
    %254 = math.rsqrt %253 : vector<8x1xf32>
    %255 = vector.broadcast %254 : vector<8x1xf32> to vector<8x32xf32>
    %256 = arith.mulf %251, %255 : vector<8x32xf32>
    %257 = vector.broadcast %236 : vector<1x32xf32> to vector<8x32xf32>
    %258 = arith.mulf %256, %257 : vector<8x32xf32>
    %259 = vector.broadcast %238 : vector<1x32xf32> to vector<8x32xf32>
    %260 = arith.addf %258, %259 : vector<8x32xf32>
    %261 = arith.truncf %260 : vector<8x32xf32> to vector<8x32xbf16>
    %c1_111 = arith.constant 1 : index
    %c0_112 = arith.constant 0 : index
    %c0_113 = arith.constant 0 : index
    %262 = vector.load %arg13[%c1_111, %c0_112, %c0_113] : memref<2x32x64xbf16, #tpu.memory_space<vmem>>, vector<1x32x64xbf16>
    %263 = vector.shape_cast %262 : vector<1x32x64xbf16> to vector<32x64xbf16>
    %cst_114 = arith.constant dense<0.000000e+00> : vector<8x64xf32>
    %264 = tpu.matmul %261, %263, %cst_114 {dimension_numbers = #tpu.dot_dimension_numbers<[1], [0], [0], [1], [0, 0, 1, 1], [], []>} : vector<8x32xbf16>, vector<32x64xbf16>, vector<8x64xf32> -> vector<8x64xf32>
    %c1_115 = arith.constant 1 : index
    %c0_116 = arith.constant 0 : index
    %c0_117 = arith.constant 0 : index
    %265 = vector.load %arg14[%c1_115, %c0_116, %c0_117] : memref<2x1x64xf32, #tpu.memory_space<vmem>>, vector<1x1x64xf32>
    %266 = vector.shape_cast %265 : vector<1x1x64xf32> to vector<1x64xf32>
    %267 = vector.broadcast %266 : vector<1x64xf32> to vector<8x64xf32>
    %268 = arith.addf %264, %267 : vector<8x64xf32>
    %cst_118 = arith.constant 5.000000e-01 : f32
    %269 = vector.broadcast %cst_118 : f32 to vector<8x64xf32>
    %270 = arith.mulf %269, %268 : vector<8x64xf32>
    %271 = arith.mulf %268, %268 : vector<8x64xf32>
    %272 = arith.mulf %271, %268 : vector<8x64xf32>
    %cst_119 = arith.constant 4.471500e-02 : f32
    %273 = vector.broadcast %cst_119 : f32 to vector<8x64xf32>
    %274 = arith.mulf %273, %272 : vector<8x64xf32>
    %275 = arith.addf %268, %274 : vector<8x64xf32>
    %cst_120 = arith.constant 0.797884583 : f32
    %276 = vector.broadcast %cst_120 : f32 to vector<8x64xf32>
    %277 = arith.mulf %276, %275 : vector<8x64xf32>
    %278 = math.tanh %277 : vector<8x64xf32>
    %cst_121 = arith.constant 1.000000e+00 : f32
    %279 = vector.broadcast %cst_121 : f32 to vector<8x64xf32>
    %280 = arith.addf %279, %278 : vector<8x64xf32>
    %281 = arith.mulf %270, %280 : vector<8x64xf32>
    %282 = arith.truncf %281 : vector<8x64xf32> to vector<8x64xbf16>
    %c1_122 = arith.constant 1 : index
    %c0_123 = arith.constant 0 : index
    %c0_124 = arith.constant 0 : index
    %283 = vector.load %arg15[%c1_122, %c0_123, %c0_124] : memref<2x64x32xbf16, #tpu.memory_space<vmem>>, vector<1x64x32xbf16>
    %284 = vector.shape_cast %283 : vector<1x64x32xbf16> to vector<64x32xbf16>
    %cst_125 = arith.constant dense<0.000000e+00> : vector<8x32xf32>
    %285 = tpu.matmul %282, %284, %cst_125 {dimension_numbers = #tpu.dot_dimension_numbers<[1], [0], [0], [1], [0, 0, 1, 1], [], []>} : vector<8x64xbf16>, vector<64x32xbf16>, vector<8x32xf32> -> vector<8x32xf32>
    %c1_126 = arith.constant 1 : index
    %c0_127 = arith.constant 0 : index
    %c0_128 = arith.constant 0 : index
    %286 = vector.load %arg16[%c1_126, %c0_127, %c0_128] : memref<2x1x32xf32, #tpu.memory_space<vmem>>, vector<1x1x32xf32>
    %287 = vector.shape_cast %286 : vector<1x1x32xf32> to vector<1x32xf32>
    %288 = vector.broadcast %287 : vector<1x32xf32> to vector<8x32xf32>
    %289 = arith.addf %285, %288 : vector<8x32xf32>
    %290 = arith.addf %289, %260 : vector<8x32xf32>
    %c1_129 = arith.constant 1 : index
    %c0_130 = arith.constant 0 : index
    %c0_131 = arith.constant 0 : index
    %291 = vector.load %arg17[%c1_129, %c0_130, %c0_131] : memref<2x1x32xf32, #tpu.memory_space<vmem>>, vector<1x1x32xf32>
    %292 = vector.shape_cast %291 : vector<1x1x32xf32> to vector<1x32xf32>
    %c1_132 = arith.constant 1 : index
    %c0_133 = arith.constant 0 : index
    %c0_134 = arith.constant 0 : index
    %293 = vector.load %arg18[%c1_132, %c0_133, %c0_134] : memref<2x1x32xf32, #tpu.memory_space<vmem>>, vector<1x1x32xf32>
    %294 = vector.shape_cast %293 : vector<1x1x32xf32> to vector<1x32xf32>
    %cst_135 = arith.constant dense<0.000000e+00> : vector<8xf32>
    %295 = vector.multi_reduction <add>, %290, %cst_135 [1] : vector<8x32xf32> to vector<8xf32>
    %296 = vector.shape_cast %295 : vector<8xf32> to vector<8x1xf32>
    %cst_136 = arith.constant 3.200000e+01 : f32
    %297 = vector.broadcast %cst_136 : f32 to vector<8x1xf32>
    %298 = arith.divf %296, %297 : vector<8x1xf32>
    %299 = vector.broadcast %298 : vector<8x1xf32> to vector<8x32xf32>
    %300 = arith.subf %290, %299 : vector<8x32xf32>
    %301 = arith.mulf %300, %300 : vector<8x32xf32>
    %cst_137 = arith.constant dense<0.000000e+00> : vector<8xf32>
    %302 = vector.multi_reduction <add>, %301, %cst_137 [1] : vector<8x32xf32> to vector<8xf32>
    %303 = vector.shape_cast %302 : vector<8xf32> to vector<8x1xf32>
    %cst_138 = arith.constant 3.200000e+01 : f32
    %304 = vector.broadcast %cst_138 : f32 to vector<8x1xf32>
    %305 = arith.divf %303, %304 : vector<8x1xf32>
    %306 = vector.broadcast %298 : vector<8x1xf32> to vector<8x32xf32>
    %307 = arith.subf %290, %306 : vector<8x32xf32>
    %cst_139 = arith.constant 9.99999996E-13 : f32
    %308 = vector.broadcast %cst_139 : f32 to vector<8x1xf32>
    %309 = arith.addf %305, %308 : vector<8x1xf32>
    %310 = math.rsqrt %309 : vector<8x1xf32>
    %311 = vector.broadcast %310 : vector<8x1xf32> to vector<8x32xf32>
    %312 = arith.mulf %307, %311 : vector<8x32xf32>
    %313 = vector.broadcast %292 : vector<1x32xf32> to vector<8x32xf32>
    %314 = arith.mulf %312, %313 : vector<8x32xf32>
    %315 = vector.broadcast %294 : vector<1x32xf32> to vector<8x32xf32>
    %316 = arith.addf %314, %315 : vector<8x32xf32>
    %317 = vector.extract_strided_slice %316 {offsets = [0, 0], sizes = [1, 32], strides = [1, 1]} : vector<8x32xf32> to vector<1x32xf32>
    %318 = arith.truncf %317 : vector<1x32xf32> to vector<1x32xbf16>
    %c0_140 = arith.constant 0 : index
    %c0_141 = arith.constant 0 : index
    %319 = vector.load %arg19[%c0_140, %c0_141] : memref<32x128xbf16, #tpu.memory_space<vmem>>, vector<32x128xbf16>
    %cst_142 = arith.constant dense<0.000000e+00> : vector<1x128xf32>
    %320 = tpu.matmul %318, %319, %cst_142 {dimension_numbers = #tpu.dot_dimension_numbers<[1], [0], [0], [1], [0, 0, 1, 1], [], []>} : vector<1x32xbf16>, vector<32x128xbf16>, vector<1x128xf32> -> vector<1x128xf32>
    %c0_143 = arith.constant 0 : index
    %c0_144 = arith.constant 0 : index
    %321 = vector.load %arg20[%c0_143, %c0_144] : memref<1x128xf32, #tpu.memory_space<vmem>>, vector<1x128xf32>
    %322 = arith.addf %320, %321 : vector<1x128xf32>
    %c0_145 = arith.constant 0 : index
    %c0_146 = arith.constant 0 : index
    %c0_147 = arith.constant 0 : index
    %323 = vector.load %arg21[%c0_145, %c0_146, %c0_147] : memref<1x1x128xf32, #tpu.memory_space<vmem>>, vector<1x1x128xf32>
    %324 = vector.shape_cast %323 : vector<1x1x128xf32> to vector<1x128xf32>
    %325 = vector.shape_cast %322 : vector<1x128xf32> to vector<1x1x128xf32>
    tpu.vector_store %arg21[%c0_145, %c0_146, %c0_147], %325 {strides = array<i32>} : memref<1x1x128xf32, #tpu.memory_space<vmem>>, vector<1x1x128xf32>,
    return
  }
  func.func @transform_0(%arg0: i32) -> (i32, i32, i32) {
    %c0_i32 = arith.constant 0 : i32
    %c0_i32_0 = arith.constant 0 : i32
    %c0_i32_1 = arith.constant 0 : i32
    return %arg0, %c0_i32, %c0_i32_0 : i32, i32, i32
  }
  func.func @transform_1(%arg0: i32) -> (i32, i32) {
    %c0_i32 = arith.constant 0 : i32
    %c0_i32_0 = arith.constant 0 : i32
    %c0_i32_1 = arith.constant 0 : i32
    return %c0_i32, %c0_i32_0 : i32, i32
  }
  func.func @transform_2(%arg0: i32) -> (i32, i32) {
    %c0_i32 = arith.constant 0 : i32
    %c0_i32_0 = arith.constant 0 : i32
    %c0_i32_1 = arith.constant 0 : i32
    return %c0_i32, %c0_i32_0 : i32, i32
  }
  func.func @transform_3(%arg0: i32) -> (i32, i32) {
    %c0_i32 = arith.constant 0 : i32
    %c0_i32_0 = arith.constant 0 : i32
    %c0_i32_1 = arith.constant 0 : i32
    return %c0_i32, %c0_i32_0 : i32, i32
  }
  func.func @transform_4(%arg0: i32) -> (i32, i32) {
    %c0_i32 = arith.constant 0 : i32
    %c0_i32_0 = arith.constant 0 : i32
    %c0_i32_1 = arith.constant 0 : i32
    return %c0_i32, %c0_i32_0 : i32, i32
  }
  func.func @transform_5(%arg0: i32) -> (i32, i32, i32) {
    %c0_i32 = arith.constant 0 : i32
    %c0_i32_0 = arith.constant 0 : i32
    %c0_i32_1 = arith.constant 0 : i32
    return %arg0, %c0_i32, %c0_i32_0 : i32, i32, i32
  }
  func.func @transform_6(%arg0: i32) -> (i32, i32, i32) {
    %c0_i32 = arith.constant 0 : i32
    %c0_i32_0 = arith.constant 0 : i32
    %c0_i32_1 = arith.constant 0 : i32
    %c0_i32_2 = arith.constant 0 : i32
    return %c0_i32, %c0_i32_0, %c0_i32_1 : i32, i32, i32
  }
  func.func @transform_7(%arg0: i32) -> (i32, i32, i32) {
    %c0_i32 = arith.constant 0 : i32
    %c0_i32_0 = arith.constant 0 : i32
    %c0_i32_1 = arith.constant 0 : i32
    %c0_i32_2 = arith.constant 0 : i32
    return %c0_i32, %c0_i32_0, %c0_i32_1 : i32, i32, i32
  }
  func.func @transform_8(%arg0: i32) -> (i32, i32, i32) {
    %c0_i32 = arith.constant 0 : i32
    %c0_i32_0 = arith.constant 0 : i32
    %c0_i32_1 = arith.constant 0 : i32
    %c0_i32_2 = arith.constant 0 : i32
    return %c0_i32, %c0_i32_0, %c0_i32_1 : i32, i32, i32
  }
  func.func @transform_9(%arg0: i32) -> (i32, i32, i32) {
    %c0_i32 = arith.constant 0 : i32
    %c0_i32_0 = arith.constant 0 : i32
    %c0_i32_1 = arith.constant 0 : i32
    %c0_i32_2 = arith.constant 0 : i32
    return %c0_i32, %c0_i32_0, %c0_i32_1 : i32, i32, i32
  }
  func.func @transform_10(%arg0: i32) -> (i32, i32, i32) {
    %c0_i32 = arith.constant 0 : i32
    %c0_i32_0 = arith.constant 0 : i32
    %c0_i32_1 = arith.constant 0 : i32
    %c0_i32_2 = arith.constant 0 : i32
    return %c0_i32, %c0_i32_0, %c0_i32_1 : i32, i32, i32
  }
  func.func @transform_11(%arg0: i32) -> (i32, i32, i32) {
    %c0_i32 = arith.constant 0 : i32
    %c0_i32_0 = arith.constant 0 : i32
    %c0_i32_1 = arith.constant 0 : i32
    %c0_i32_2 = arith.constant 0 : i32
    return %c0_i32, %c0_i32_0, %c0_i32_1 : i32, i32, i32
  }
  func.func @transform_12(%arg0: i32) -> (i32, i32, i32) {
    %c0_i32 = arith.constant 0 : i32
    %c0_i32_0 = arith.constant 0 : i32
    %c0_i32_1 = arith.constant 0 : i32
    %c0_i32_2 = arith.constant 0 : i32
    return %c0_i32, %c0_i32_0, %c0_i32_1 : i32, i32, i32
  }
  func.func @transform_13(%arg0: i32) -> (i32, i32, i32) {
    %c0_i32 = arith.constant 0 : i32
    %c0_i32_0 = arith.constant 0 : i32
    %c0_i32_1 = arith.constant 0 : i32
    %c0_i32_2 = arith.constant 0 : i32
    return %c0_i32, %c0_i32_0, %c0_i32_1 : i32, i32, i32
  }
  func.func @transform_14(%arg0: i32) -> (i32, i32, i32) {
    %c0_i32 = arith.constant 0 : i32
    %c0_i32_0 = arith.constant 0 : i32
    %c0_i32_1 = arith.constant 0 : i32
    %c0_i32_2 = arith.constant 0 : i32
    return %c0_i32, %c0_i32_0, %c0_i32_1 : i32, i32, i32
  }
  func.func @transform_15(%arg0: i32) -> (i32, i32, i32) {
    %c0_i32 = arith.constant 0 : i32
    %c0_i32_0 = arith.constant 0 : i32
    %c0_i32_1 = arith.constant 0 : i32
    %c0_i32_2 = arith.constant 0 : i32
    return %c0_i32, %c0_i32_0, %c0_i32_1 : i32, i32, i32
  }
  func.func @transform_16(%arg0: i32) -> (i32, i32, i32) {
    %c0_i32 = arith.constant 0 : i32
    %c0_i32_0 = arith.constant 0 : i32
    %c0_i32_1 = arith.constant 0 : i32
    %c0_i32_2 = arith.constant 0 : i32
    return %c0_i32, %c0_i32_0, %c0_i32_1 : i32, i32, i32
  }
  func.func @transform_17(%arg0: i32) -> (i32, i32, i32) {
    %c0_i32 = arith.constant 0 : i32
    %c0_i32_0 = arith.constant 0 : i32
    %c0_i32_1 = arith.constant 0 : i32
    %c0_i32_2 = arith.constant 0 : i32
    return %c0_i32, %c0_i32_0, %c0_i32_1 : i32, i32, i32
  }
  func.func @transform_18(%arg0: i32) -> (i32, i32) {
    %c0_i32 = arith.constant 0 : i32
    %c0_i32_0 = arith.constant 0 : i32
    %c0_i32_1 = arith.constant 0 : i32
    return %c0_i32, %c0_i32_0 : i32, i32
  }
  func.func @transform_19(%arg0: i32) -> (i32, i32) {
    %c0_i32 = arith.constant 0 : i32
    %c0_i32_0 = arith.constant 0 : i32
    %c0_i32_1 = arith.constant 0 : i32
    return %c0_i32, %c0_i32_0 : i32, i32
  }
  func.func @transform_20(%arg0: i32) -> (i32, i32, i32) {
    %c0_i32 = arith.constant 0 : i32
    %c0_i32_0 = arith.constant 0 : i32
    %c0_i32_1 = arith.constant 0 : i32
    return %arg0, %c0_i32, %c0_i32_0 : i32, i32, i32
  }
}

</mosaic_0001>

<llo_original>
// kernel: bert_sent_classifier_forward.1
$region0: #{bert_sent_classifier_forward.1}
  #allocation0 [shape = 'u32[]', space=smem, size = 0x4, offset = 0x4, fixed_abs, tag = 'smem constant byte address 0x4 - core index']
  #allocation1 [shape = 'u32[72,128]{1,0:T(1,128)}', space=vmem, size = 0x9000, scoped, tag = 'internal scratch']
  %s0 = inlined_call_operand.vmem [shape: f32[2,8,32], index: 0, kind: input, shape index: {}]
  %s1 = inlined_call_operand.vmem [shape: f32[8,32], index: 1, kind: input, shape index: {}]
  %s2 = inlined_call_operand.vmem [shape: f32[1,32], index: 2, kind: input, shape index: {}]
  %s3 = inlined_call_operand.vmem [shape: f32[1,32], index: 3, kind: input, shape index: {}]
  %s4 = inlined_call_operand.vmem [shape: f32[1,32], index: 4, kind: input, shape index: {}]
  %s5 = inlined_call_operand.vmem [shape: f32[2,1,8], index: 5, kind: input, shape index: {}]
  %s6 = inlined_call_operand.vmem [shape: bf16[2,32,96], index: 6, kind: input, shape index: {}]
  %s7 = inlined_call_operand.vmem [shape: f32[2,1,96], index: 7, kind: input, shape index: {}]
  %s8 = inlined_call_operand.vmem [shape: bf16[2,32,32], index: 8, kind: input, shape index: {}]
  %s9 = inlined_call_operand.vmem [shape: f32[2,1,32], index: 9, kind: input, shape index: {}]
  %s10 = inlined_call_operand.vmem [shape: f32[2,1,32], index: 10, kind: input, shape index: {}]
  %s11 = inlined_call_operand.vmem [shape: f32[2,1,32], index: 11, kind: input, shape index: {}]
  %s12 = inlined_call_operand.vmem [shape: bf16[2,32,64], index: 12, kind: input, shape index: {}]
  %s13 = inlined_call_operand.vmem [shape: f32[2,1,64], index: 13, kind: input, shape index: {}]
  %s14 = inlined_call_operand.vmem [shape: bf16[2,64,32], index: 14, kind: input, shape index: {}]
  %s15 = inlined_call_operand.vmem [shape: f32[2,1,32], index: 15, kind: input, shape index: {}]
  %s16 = inlined_call_operand.vmem [shape: f32[2,1,32], index: 16, kind: input, shape index: {}]
  %s17 = inlined_call_operand.vmem [shape: f32[2,1,32], index: 17, kind: input, shape index: {}]
  %s18 = inlined_call_operand.vmem [shape: bf16[32,128], index: 18, kind: input, shape index: {}]
  %s19 = inlined_call_operand.vmem [shape: f32[1,128], index: 19, kind: input, shape index: {}]
  %s20 = inlined_call_operand.hbm [shape: f32[2,1,128], index: 20, kind: output, shape index: {}]
  %s21 = sld [smem:[#allocation0]]
  $region113: #{bert_sent_classifier_forward.1} parent=0
    _
  %s23 = ssub.s32 1, %s21
  %s24 = scalar_select 0, %s23, %s21
  $region1: #{bert_sent_classifier_forward.1} parent=0
    #allocation2 [shape = 'u8[1024]{0}', space=vmem, size = 0x400, scoped, tag = 'output window, operand 0']
    #allocation3 [shape = 's32[2]{0}', space=sflag, size = 0x8, scoped, tag = 'scoped memory for bert_sent_classifier_forward.1']
    %25 = vsyncpa [#allocation3], 0
    %s26 = scalar_lea.sflag [#allocation3], 1
    %27 = vsyncpa %s26, 0
    loop: start=0, step=1, limit=4
    $region2: #{bert_sent_classifier_forward.1} parent=1 // loop_pre_header
      _
    $region3: #{bert_sent_classifier_forward.1} parent=1 // loop_header
      %s29 = sphi 0, %s33
      %p30 = scmp.ge.s32.totalorder %s29, 4
      %s39 = sphi 0, %s41
      %s42 = sphi 0, %s39
      %s43 = sphi 0, %s42
      %s59 = sphi 0, %s43
      %s63 = sphi 0, %s63
      %s65 = sphi 0, %s63
      %s66 = sphi 0, %s65
      %s80 = sphi 0, %s66
      %s84 = sphi 0, %s84
      %s86 = sphi 0, %s84
      %s87 = sphi 0, %s86
      %s101 = sphi 0, %s87
      %s105 = sphi 0, %s105
      %s107 = sphi 0, %s105
      %s108 = sphi 0, %s107
      %s122 = sphi 0, %s108
      %s126 = sphi 0, %s126
      %s128 = sphi 0, %s126
      %s129 = sphi 0, %s128
      %s143 = sphi 0, %s129
      %s149 = sphi 0, %s151
      %s152 = sphi 0, %s149
      %s153 = sphi 0, %s152
      %s169 = sphi 0, %s153
      %s173 = sphi 0, %s173
      %s175 = sphi 0, %s173
      %s176 = sphi 0, %s175
      %s190 = sphi 0, %s176
      %s194 = sphi 0, %s194
      %s196 = sphi 0, %s194
      %s197 = sphi 0, %s196
      %s211 = sphi 0, %s197
      %s215 = sphi 0, %s215
      %s217 = sphi 0, %s215
      %s218 = sphi 0, %s217
      %s232 = sphi 0, %s218
      %s236 = sphi 0, %s236
      %s238 = sphi 0, %s236
      %s239 = sphi 0, %s238
      %s253 = sphi 0, %s239
      %s257 = sphi 0, %s257
      %s259 = sphi 0, %s257
      %s260 = sphi 0, %s259
      %s274 = sphi 0, %s260
      %s278 = sphi 0, %s278
      %s280 = sphi 0, %s278
      %s281 = sphi 0, %s280
      %s295 = sphi 0, %s281
      %s299 = sphi 0, %s299
      %s301 = sphi 0, %s299
      %s302 = sphi 0, %s301
      %s316 = sphi 0, %s302
      %s320 = sphi 0, %s320
      %s322 = sphi 0, %s320
      %s323 = sphi 0, %s322
      %s337 = sphi 0, %s323
      %s341 = sphi 0, %s341
      %s343 = sphi 0, %s341
      %s344 = sphi 0, %s343
      %s358 = sphi 0, %s344
      %s362 = sphi 0, %s362
      %s364 = sphi 0, %s362
      %s365 = sphi 0, %s364
      %s379 = sphi 0, %s365
      %s383 = sphi 0, %s383
      %s385 = sphi 0, %s383
      %s386 = sphi 0, %s385
      %s400 = sphi 0, %s386
      %s404 = sphi 0, %s404
      %s406 = sphi 0, %s404
      %s407 = sphi 0, %s406
      %s421 = sphi 0, %s407
      %s425 = sphi 0, %s425
      %s427 = sphi 0, %s425
      %s428 = sphi 0, %s427
      %s442 = sphi 0, %s428
      %s446 = sphi 0, %s446
      %s448 = sphi 0, %s446
      %s449 = sphi 0, %s448
      %s463 = sphi 0, %s449
      %s469 = sphi 0, %s471
      %s472 = sphi 0, %s469
      %s473 = sphi 0, %s472
      %s489 = sphi 0, %s473
    $region4: #{bert_sent_classifier_forward.1} parent=1 // loop_header_branch
      %32 = sbr.rel (%p30) target = $region8
    $region5: #{bert_sent_classifier_forward.1} parent=1 // loop_body
      %s34 = ssub.s32 %s29, 1
      %s35 = ssub.s32 %s29, 2
      %s36 = sadd.s32 %s29, 1
      %s37 = ssub.s32 %s29, %s36
      %p38 = scmp.eq.s32.totalorder %s37, 0
      %s40 = sadd.s32 %s39, 1
      %s41 = scalar_select %p38, %s39, %s40
      %p44 = pneg %p38
      %p45 = scmp.eq.s32.totalorder %s29, 1
      %p46 = por %p44, %p45
      %p47 = scmp.ne.s32.totalorder %s39, %s42
      %p48 = scmp.eq.s32.totalorder %s29, 0
      %p49 = por %p47, %p48
      %p50 = scmp.ne.s32.totalorder %s39, %s42
      %p51 = scmp.eq.s32.totalorder %s34, 1
      %p52 = por %p50, %p51
      %p53 = scmp.ne.s32.totalorder %s42, %s43
      %p54 = scmp.eq.s32.totalorder %s34, 0
      %p55 = por %p53, %p54
      %p56 = scmp.ne.s32.totalorder %s42, %s43
      %p57 = scmp.eq.s32.totalorder %s35, 1
      %p58 = por %p56, %p57
      %p60 = scmp.ne.s32.totalorder %s43, %s59
      %p61 = scmp.eq.s32.totalorder %s35, 0
      %p62 = por %p60, %p61
      %s64 = sadd.s32 %s63, 1
      %p67 = scmp.eq.s32.totalorder %s29, 1
      %p68 = scmp.ne.s32.totalorder %s63, %s65
      %p69 = scmp.eq.s32.totalorder %s29, 0
      %p70 = por %p68, %p69
      %p71 = scmp.ne.s32.totalorder %s63, %s65
      %p72 = scmp.eq.s32.totalorder %s34, 1
      %p73 = por %p71, %p72
      %p74 = scmp.ne.s32.totalorder %s65, %s66
      %p75 = scmp.eq.s32.totalorder %s34, 0
      %p76 = por %p74, %p75
      %p77 = scmp.ne.s32.totalorder %s65, %s66
      %p78 = scmp.eq.s32.totalorder %s35, 1
      %p79 = por %p77, %p78
      %p81 = scmp.ne.s32.totalorder %s66, %s80
      %p82 = scmp.eq.s32.totalorder %s35, 0
      %p83 = por %p81, %p82
      %s85 = sadd.s32 %s84, 1
      %p88 = scmp.eq.s32.totalorder %s29, 1
      %p89 = scmp.ne.s32.totalorder %s84, %s86
      %p90 = scmp.eq.s32.totalorder %s29, 0
      %p91 = por %p89, %p90
      %p92 = scmp.ne.s32.totalorder %s84, %s86
      %p93 = scmp.eq.s32.totalorder %s34, 1
      %p94 = por %p92, %p93
      %p95 = scmp.ne.s32.totalorder %s86, %s87
      %p96 = scmp.eq.s32.totalorder %s34, 0
      %p97 = por %p95, %p96
      %p98 = scmp.ne.s32.totalorder %s86, %s87
      %p99 = scmp.eq.s32.totalorder %s35, 1
      %p100 = por %p98, %p99
      %p102 = scmp.ne.s32.totalorder %s87, %s101
      %p103 = scmp.eq.s32.totalorder %s35, 0
      %p104 = por %p102, %p103
      %s106 = sadd.s32 %s105, 1
      %p109 = scmp.eq.s32.totalorder %s29, 1
      %p110 = scmp.ne.s32.totalorder %s105, %s107
      %p111 = scmp.eq.s32.totalorder %s29, 0
      %p112 = por %p110, %p111
      %p113 = scmp.ne.s32.totalorder %s105, %s107
      %p114 = scmp.eq.s32.totalorder %s34, 1
      %p115 = por %p113, %p114
      %p116 = scmp.ne.s32.totalorder %s107, %s108
      %p117 = scmp.eq.s32.totalorder %s34, 0
      %p118 = por %p116, %p117
      %p119 = scmp.ne.s32.totalorder %s107, %s108
      %p120 = scmp.eq.s32.totalorder %s35, 1
      %p121 = por %p119, %p120
      %p123 = scmp.ne.s32.totalorder %s108, %s122
      %p124 = scmp.eq.s32.totalorder %s35, 0
      %p125 = por %p123, %p124
      %s127 = sadd.s32 %s126, 1
      %p130 = scmp.eq.s32.totalorder %s29, 1
      %p131 = scmp.ne.s32.totalorder %s126, %s128
      %p132 = scmp.eq.s32.totalorder %s29, 0
      %p133 = por %p131, %p132
      %p134 = scmp.ne.s32.totalorder %s126, %s128
      %p135 = scmp.eq.s32.totalorder %s34, 1
      %p136 = por %p134, %p135
      %p137 = scmp.ne.s32.totalorder %s128, %s129
      %p138 = scmp.eq.s32.totalorder %s34, 0
      %p139 = por %p137, %p138
      %p140 = scmp.ne.s32.totalorder %s128, %s129
      %p141 = scmp.eq.s32.totalorder %s35, 1
      %p142 = por %p140, %p141
      %p144 = scmp.ne.s32.totalorder %s129, %s143
      %p145 = scmp.eq.s32.totalorder %s35, 0
      %p146 = por %p144, %p145
      %s147 = ssub.s32 %s29, %s36
      %p148 = scmp.eq.s32.totalorder %s147, 0
      %s150 = sadd.s32 %s149, 1
      %s151 = scalar_select %p148, %s149, %s150
      %p154 = pneg %p148
      %p155 = scmp.eq.s32.totalorder %s29, 1
      %p156 = por %p154, %p155
      %p157 = scmp.ne.s32.totalorder %s149, %s152
      %p158 = scmp.eq.s32.totalorder %s29, 0
      %p159 = por %p157, %p158
      %p160 = scmp.ne.s32.totalorder %s149, %s152
      %p161 = scmp.eq.s32.totalorder %s34, 1
      %p162 = por %p160, %p161
      %p163 = scmp.ne.s32.totalorder %s152, %s153
      %p164 = scmp.eq.s32.totalorder %s34, 0
      %p165 = por %p163, %p164
      %p166 = scmp.ne.s32.totalorder %s152, %s153
      %p167 = scmp.eq.s32.totalorder %s35, 1
      %p168 = por %p166, %p167
      %p170 = scmp.ne.s32.totalorder %s153, %s169
      %p171 = scmp.eq.s32.totalorder %s35, 0
      %p172 = por %p170, %p171
      %s174 = sadd.s32 %s173, 1
      %p177 = scmp.eq.s32.totalorder %s29, 1
      %p178 = scmp.ne.s32.totalorder %s173, %s175
      %p179 = scmp.eq.s32.totalorder %s29, 0
      %p180 = por %p178, %p179
      %p181 = scmp.ne.s32.totalorder %s173, %s175
      %p182 = scmp.eq.s32.totalorder %s34, 1
      %p183 = por %p181, %p182
      %p184 = scmp.ne.s32.totalorder %s175, %s176
      %p185 = scmp.eq.s32.totalorder %s34, 0
      %p186 = por %p184, %p185
      %p187 = scmp.ne.s32.totalorder %s175, %s176
      %p188 = scmp.eq.s32.totalorder %s35, 1
      %p189 = por %p187, %p188
      %p191 = scmp.ne.s32.totalorder %s176, %s190
      %p192 = scmp.eq.s32.totalorder %s35, 0
      %p193 = por %p191, %p192
      %s195 = sadd.s32 %s194, 1
      %p198 = scmp.eq.s32.totalorder %s29, 1
      %p199 = scmp.ne.s32.totalorder %s194, %s196
      %p200 = scmp.eq.s32.totalorder %s29, 0
      %p201 = por %p199, %p200
      %p202 = scmp.ne.s32.totalorder %s194, %s196
      %p203 = scmp.eq.s32.totalorder %s34, 1
      %p204 = por %p202, %p203
      %p205 = scmp.ne.s32.totalorder %s196, %s197
      %p206 = scmp.eq.s32.totalorder %s34, 0
      %p207 = por %p205, %p206
      %p208 = scmp.ne.s32.totalorder %s196, %s197
      %p209 = scmp.eq.s32.totalorder %s35, 1
      %p210 = por %p208, %p209
      %p212 = scmp.ne.s32.totalorder %s197, %s211
      %p213 = scmp.eq.s32.totalorder %s35, 0
      %p214 = por %p212, %p213
      %s216 = sadd.s32 %s215, 1
      %p219 = scmp.eq.s32.totalorder %s29, 1
      %p220 = scmp.ne.s32.totalorder %s215, %s217
      %p221 = scmp.eq.s32.totalorder %s29, 0
      %p222 = por %p220, %p221
      %p223 = scmp.ne.s32.totalorder %s215, %s217
      %p224 = scmp.eq.s32.totalorder %s34, 1
      %p225 = por %p223, %p224
      %p226 = scmp.ne.s32.totalorder %s217, %s218
      %p227 = scmp.eq.s32.totalorder %s34, 0
      %p228 = por %p226, %p227
      %p229 = scmp.ne.s32.totalorder %s217, %s218
      %p230 = scmp.eq.s32.totalorder %s35, 1
      %p231 = por %p229, %p230
      %p233 = scmp.ne.s32.totalorder %s218, %s232
      %p234 = scmp.eq.s32.totalorder %s35, 0
      %p235 = por %p233, %p234
      %s237 = sadd.s32 %s236, 1
      %p240 = scmp.eq.s32.totalorder %s29, 1
      %p241 = scmp.ne.s32.totalorder %s236, %s238
      %p242 = scmp.eq.s32.totalorder %s29, 0
      %p243 = por %p241, %p242
      %p244 = scmp.ne.s32.totalorder %s236, %s238
      %p245 = scmp.eq.s32.totalorder %s34, 1
      %p246 = por %p244, %p245
      %p247 = scmp.ne.s32.totalorder %s238, %s239
      %p248 = scmp.eq.s32.totalorder %s34, 0
      %p249 = por %p247, %p248
      %p250 = scmp.ne.s32.totalorder %s238, %s239
      %p251 = scmp.eq.s32.totalorder %s35, 1
      %p252 = por %p250, %p251
      %p254 = scmp.ne.s32.totalorder %s239, %s253
      %p255 = scmp.eq.s32.totalorder %s35, 0
      %p256 = por %p254, %p255
      %s258 = sadd.s32 %s257, 1
      %p261 = scmp.eq.s32.totalorder %s29, 1
      %p262 = scmp.ne.s32.totalorder %s257, %s259
      %p263 = scmp.eq.s32.totalorder %s29, 0
      %p264 = por %p262, %p263
      %p265 = scmp.ne.s32.totalorder %s257, %s259
      %p266 = scmp.eq.s32.totalorder %s34, 1
      %p267 = por %p265, %p266
      %p268 = scmp.ne.s32.totalorder %s259, %s260
      %p269 = scmp.eq.s32.totalorder %s34, 0
      %p270 = por %p268, %p269
      %p271 = scmp.ne.s32.totalorder %s259, %s260
      %p272 = scmp.eq.s32.totalorder %s35, 1
      %p273 = por %p271, %p272
      %p275 = scmp.ne.s32.totalorder %s260, %s274
      %p276 = scmp.eq.s32.totalorder %s35, 0
      %p277 = por %p275, %p276
      %s279 = sadd.s32 %s278, 1
      %p282 = scmp.eq.s32.totalorder %s29, 1
      %p283 = scmp.ne.s32.totalorder %s278, %s280
      %p284 = scmp.eq.s32.totalorder %s29, 0
      %p285 = por %p283, %p284
      %p286 = scmp.ne.s32.totalorder %s278, %s280
      %p287 = scmp.eq.s32.totalorder %s34, 1
      %p288 = por %p286, %p287
      %p289 = scmp.ne.s32.totalorder %s280, %s281
      %p290 = scmp.eq.s32.totalorder %s34, 0
      %p291 = por %p289, %p290
      %p292 = scmp.ne.s32.totalorder %s280, %s281
      %p293 = scmp.eq.s32.totalorder %s35, 1
      %p294 = por %p292, %p293
      %p296 = scmp.ne.s32.totalorder %s281, %s295
      %p297 = scmp.eq.s32.totalorder %s35, 0
      %p298 = por %p296, %p297
      %s300 = sadd.s32 %s299, 1
      %p303 = scmp.eq.s32.totalorder %s29, 1
      %p304 = scmp.ne.s32.totalorder %s299, %s301
      %p305 = scmp.eq.s32.totalorder %s29, 0
      %p306 = por %p304, %p305
      %p307 = scmp.ne.s32.totalorder %s299, %s301
      %p308 = scmp.eq.s32.totalorder %s34, 1
      %p309 = por %p307, %p308
      %p310 = scmp.ne.s32.totalorder %s301, %s302
      %p311 = scmp.eq.s32.totalorder %s34, 0
      %p312 = por %p310, %p311
      %p313 = scmp.ne.s32.totalorder %s301, %s302
      %p314 = scmp.eq.s32.totalorder %s35, 1
      %p315 = por %p313, %p314
      %p317 = scmp.ne.s32.totalorder %s302, %s316
      %p318 = scmp.eq.s32.totalorder %s35, 0
      %p319 = por %p317, %p318
      %s321 = sadd.s32 %s320, 1
      %p324 = scmp.eq.s32.totalorder %s29, 1
      %p325 = scmp.ne.s32.totalorder %s320, %s322
      %p326 = scmp.eq.s32.totalorder %s29, 0
      %p327 = por %p325, %p326
      %p328 = scmp.ne.s32.totalorder %s320, %s322
      %p329 = scmp.eq.s32.totalorder %s34, 1
      %p330 = por %p328, %p329
      %p331 = scmp.ne.s32.totalorder %s322, %s323
      %p332 = scmp.eq.s32.totalorder %s34, 0
      %p333 = por %p331, %p332
      %p334 = scmp.ne.s32.totalorder %s322, %s323
      %p335 = scmp.eq.s32.totalorder %s35, 1
      %p336 = por %p334, %p335
      %p338 = scmp.ne.s32.totalorder %s323, %s337
      %p339 = scmp.eq.s32.totalorder %s35, 0
      %p340 = por %p338, %p339
      %s342 = sadd.s32 %s341, 1
      %p345 = scmp.eq.s32.totalorder %s29, 1
      %p346 = scmp.ne.s32.totalorder %s341, %s343
      %p347 = scmp.eq.s32.totalorder %s29, 0
      %p348 = por %p346, %p347
      %p349 = scmp.ne.s32.totalorder %s341, %s343
      %p350 = scmp.eq.s32.totalorder %s34, 1
      %p351 = por %p349, %p350
      %p352 = scmp.ne.s32.totalorder %s343, %s344
      %p353 = scmp.eq.s32.totalorder %s34, 0
      %p354 = por %p352, %p353
      %p355 = scmp.ne.s32.totalorder %s343, %s344
      %p356 = scmp.eq.s32.totalorder %s35, 1
      %p357 = por %p355, %p356
      %p359 = scmp.ne.s32.totalorder %s344, %s358
      %p360 = scmp.eq.s32.totalorder %s35, 0
      %p361 = por %p359, %p360
      %s363 = sadd.s32 %s362, 1
      %p366 = scmp.eq.s32.totalorder %s29, 1
      %p367 = scmp.ne.s32.totalorder %s362, %s364
      %p368 = scmp.eq.s32.totalorder %s29, 0
      %p369 = por %p367, %p368
      %p370 = scmp.ne.s32.totalorder %s362, %s364
      %p371 = scmp.eq.s32.totalorder %s34, 1
      %p372 = por %p370, %p371
      %p373 = scmp.ne.s32.totalorder %s364, %s365
      %p374 = scmp.eq.s32.totalorder %s34, 0
      %p375 = por %p373, %p374
      %p376 = scmp.ne.s32.totalorder %s364, %s365
      %p377 = scmp.eq.s32.totalorder %s35, 1
      %p378 = por %p376, %p377
      %p380 = scmp.ne.s32.totalorder %s365, %s379
      %p381 = scmp.eq.s32.totalorder %s35, 0
      %p382 = por %p380, %p381
      %s384 = sadd.s32 %s383, 1
      %p387 = scmp.eq.s32.totalorder %s29, 1
      %p388 = scmp.ne.s32.totalorder %s383, %s385
      %p389 = scmp.eq.s32.totalorder %s29, 0
      %p390 = por %p388, %p389
      %p391 = scmp.ne.s32.totalorder %s383, %s385
      %p392 = scmp.eq.s32.totalorder %s34, 1
      %p393 = por %p391, %p392
      %p394 = scmp.ne.s32.totalorder %s385, %s386
      %p395 = scmp.eq.s32.totalorder %s34, 0
      %p396 = por %p394, %p395
      %p397 = scmp.ne.s32.totalorder %s385, %s386
      %p398 = scmp.eq.s32.totalorder %s35, 1
      %p399 = por %p397, %p398
      %p401 = scmp.ne.s32.totalorder %s386, %s400
      %p402 = scmp.eq.s32.totalorder %s35, 0
      %p403 = por %p401, %p402
      %s405 = sadd.s32 %s404, 1
      %p408 = scmp.eq.s32.totalorder %s29, 1
      %p409 = scmp.ne.s32.totalorder %s404, %s406
      %p410 = scmp.eq.s32.totalorder %s29, 0
      %p411 = por %p409, %p410
      %p412 = scmp.ne.s32.totalorder %s404, %s406
      %p413 = scmp.eq.s32.totalorder %s34, 1
      %p414 = por %p412, %p413
      %p415 = scmp.ne.s32.totalorder %s406, %s407
      %p416 = scmp.eq.s32.totalorder %s34, 0
      %p417 = por %p415, %p416
      %p418 = scmp.ne.s32.totalorder %s406, %s407
      %p419 = scmp.eq.s32.totalorder %s35, 1
      %p420 = por %p418, %p419
      %p422 = scmp.ne.s32.totalorder %s407, %s421
      %p423 = scmp.eq.s32.totalorder %s35, 0
      %p424 = por %p422, %p423
      %s426 = sadd.s32 %s425, 1
      %p429 = scmp.eq.s32.totalorder %s29, 1
      %p430 = scmp.ne.s32.totalorder %s425, %s427
      %p431 = scmp.eq.s32.totalorder %s29, 0
      %p432 = por %p430, %p431
      %p433 = scmp.ne.s32.totalorder %s425, %s427
      %p434 = scmp.eq.s32.totalorder %s34, 1
      %p435 = por %p433, %p434
      %p436 = scmp.ne.s32.totalorder %s427, %s428
      %p437 = scmp.eq.s32.totalorder %s34, 0
      %p438 = por %p436, %p437
      %p439 = scmp.ne.s32.totalorder %s427, %s428
      %p440 = scmp.eq.s32.totalorder %s35, 1
      %p441 = por %p439, %p440
      %p443 = scmp.ne.s32.totalorder %s428, %s442
      %p444 = scmp.eq.s32.totalorder %s35, 0
      %p445 = por %p443, %p444
      %s447 = sadd.s32 %s446, 1
      %p450 = scmp.eq.s32.totalorder %s29, 1
      %p451 = scmp.ne.s32.totalorder %s446, %s448
      %p452 = scmp.eq.s32.totalorder %s29, 0
      %p453 = por %p451, %p452
      %p454 = scmp.ne.s32.totalorder %s446, %s448
      %p455 = scmp.eq.s32.totalorder %s34, 1
      %p456 = por %p454, %p455
      %p457 = scmp.ne.s32.totalorder %s448, %s449
      %p458 = scmp.eq.s32.totalorder %s34, 0
      %p459 = por %p457, %p458
      %p460 = scmp.ne.s32.totalorder %s448, %s449
      %p461 = scmp.eq.s32.totalorder %s35, 1
      %p462 = por %p460, %p461
      %p464 = scmp.ne.s32.totalorder %s449, %s463
      %p465 = scmp.eq.s32.totalorder %s35, 0
      %p466 = por %p464, %p465
      %s467 = ssub.s32 %s29, %s36
      %p468 = scmp.eq.s32.totalorder %s467, 0
      %s470 = sadd.s32 %s469, 1
      %s471 = scalar_select %p468, %s469, %s470
      %p474 = pneg %p468
      %p475 = scmp.eq.s32.totalorder %s29, 1
      %p476 = por %p474, %p475
      %p477 = scmp.ne.s32.totalorder %s469, %s472
      %p478 = scmp.eq.s32.totalorder %s29, 0
      %p479 = por %p477, %p478
      %p480 = scmp.ne.s32.totalorder %s469, %s472
      %p481 = scmp.eq.s32.totalorder %s34, 1
      %p482 = por %p480, %p481
      %p483 = scmp.ne.s32.totalorder %s472, %s473
      %p484 = scmp.eq.s32.totalorder %s34, 0
      %p485 = por %p483, %p484
      %p486 = scmp.ne.s32.totalorder %s472, %s473
      %p487 = scmp.eq.s32.totalorder %s35, 1
      %p488 = por %p486, %p487
      %p490 = scmp.ne.s32.totalorder %s473, %s489
      %p491 = scmp.eq.s32.totalorder %s35, 0
      %p492 = por %p490, %p491
      %p493 = scmp.le.s32.totalorder 1, %s29
      %p494 = scmp.lt.s32.totalorder %s29, 3
      %p495 = pnand %p493, %p494
      %p496 = pneg %p495
      // Predicated region
      $region9: #{bert_sent_classifier_forward.1} parent=5 // pred_check
        _
      $region10: #{bert_sent_classifier_forward.1} parent=5 // pred_check_branch
        %498 = sbr.rel (%p495) target = $region12
      $region11: #{bert_sent_classifier_forward.1} parent=5 // pred_region
        %s499 = ssub.s32 %s29, 1
        // Predicated region
        $region13: #{bert_sent_classifier_forward.1} parent=11 // pred_check
          %p500 = pneg %p76
        $region14: #{bert_sent_classifier_forward.1} parent=11 // pred_check_branch
          %502 = sbr.rel (%p500) target = $region16
        $region15: #{bert_sent_classifier_forward.1} parent=11 // pred_region
          _
        $region16: #{bert_sent_classifier_forward.1} parent=11 // pred_fallthru
          _
        // Predicated region
        $region17: #{bert_sent_classifier_forward.1} parent=11 // pred_check
          %p503 = pneg %p97
        $region18: #{bert_sent_classifier_forward.1} parent=11 // pred_check_branch
          %505 = sbr.rel (%p503) target = $region20
        $region19: #{bert_sent_classifier_forward.1} parent=11 // pred_region
          _
        $region20: #{bert_sent_classifier_forward.1} parent=11 // pred_fallthru
          _
        // Predicated region
        $region21: #{bert_sent_classifier_forward.1} parent=11 // pred_check
          %p506 = pneg %p118
        $region22: #{bert_sent_classifier_forward.1} parent=11 // pred_check_branch
          %508 = sbr.rel (%p506) target = $region24
        $region23: #{bert_sent_classifier_forward.1} parent=11 // pred_region
          _
        $region24: #{bert_sent_classifier_forward.1} parent=11 // pred_fallthru
          _
        // Predicated region
        $region25: #{bert_sent_classifier_forward.1} parent=11 // pred_check
          %p509 = pneg %p139
        $region26: #{bert_sent_classifier_forward.1} parent=11 // pred_check_branch
          %511 = sbr.rel (%p509) target = $region28
        $region27: #{bert_sent_classifier_forward.1} parent=11 // pred_region
          _
        $region28: #{bert_sent_classifier_forward.1} parent=11 // pred_fallthru
          _
        // Predicated region
        $region29: #{bert_sent_classifier_forward.1} parent=11 // pred_check
          %p512 = pneg %p186
        $region30: #{bert_sent_classifier_forward.1} parent=11 // pred_check_branch
          %514 = sbr.rel (%p512) target = $region32
        $region31: #{bert_sent_classifier_forward.1} parent=11 // pred_region
          _
        $region32: #{bert_sent_classifier_forward.1} parent=11 // pred_fallthru
          _
        // Predicated region
        $region33: #{bert_sent_classifier_forward.1} parent=11 // pred_check
          %p515 = pneg %p207
        $region34: #{bert_sent_classifier_forward.1} parent=11 // pred_check_branch
          %517 = sbr.rel (%p515) target = $region36
        $region35: #{bert_sent_classifier_forward.1} parent=11 // pred_region
          _
        $region36: #{bert_sent_classifier_forward.1} parent=11 // pred_fallthru
          _
        // Predicated region
        $region37: #{bert_sent_classifier_forward.1} parent=11 // pred_check
          %p518 = pneg %p228
        $region38: #{bert_sent_classifier_forward.1} parent=11 // pred_check_branch
          %520 = sbr.rel (%p518) target = $region40
        $region39: #{bert_sent_classifier_forward.1} parent=11 // pred_region
          _
        $region40: #{bert_sent_classifier_forward.1} parent=11 // pred_fallthru
          _
        // Predicated region
        $region41: #{bert_sent_classifier_forward.1} parent=11 // pred_check
          %p521 = pneg %p249
        $region42: #{bert_sent_classifier_forward.1} parent=11 // pred_check_branch
          %523 = sbr.rel (%p521) target = $region44
        $region43: #{bert_sent_classifier_forward.1} parent=11 // pred_region
          _
        $region44: #{bert_sent_classifier_forward.1} parent=11 // pred_fallthru
          _
        // Predicated region
        $region45: #{bert_sent_classifier_forward.1} parent=11 // pred_check
          %p524 = pneg %p270
        $region46: #{bert_sent_classifier_forward.1} parent=11 // pred_check_branch
          %526 = sbr.rel (%p524) target = $region48
        $region47: #{bert_sent_classifier_forward.1} parent=11 // pred_region
          _
        $region48: #{bert_sent_classifier_forward.1} parent=11 // pred_fallthru
          _
        // Predicated region
        $region49: #{bert_sent_classifier_forward.1} parent=11 // pred_check
          %p527 = pneg %p291
        $region50: #{bert_sent_classifier_forward.1} parent=11 // pred_check_branch
          %529 = sbr.rel (%p527) target = $region52
        $region51: #{bert_sent_classifier_forward.1} parent=11 // pred_region
          _
        $region52: #{bert_sent_classifier_forward.1} parent=11 // pred_fallthru
          _
        // Predicated region
        $region53: #{bert_sent_classifier_forward.1} parent=11 // pred_check
          %p530 = pneg %p312
        $region54: #{bert_sent_classifier_forward.1} parent=11 // pred_check_branch
          %532 = sbr.rel (%p530) target = $region56
        $region55: #{bert_sent_classifier_forward.1} parent=11 // pred_region
          _
        $region56: #{bert_sent_classifier_forward.1} parent=11 // pred_fallthru
          _
        // Predicated region
        $region57: #{bert_sent_classifier_forward.1} parent=11 // pred_check
          %p533 = pneg %p333
        $region58: #{bert_sent_classifier_forward.1} parent=11 // pred_check_branch
          %535 = sbr.rel (%p533) target = $region60
        $region59: #{bert_sent_classifier_forward.1} parent=11 // pred_region
          _
        $region60: #{bert_sent_classifier_forward.1} parent=11 // pred_fallthru
          _
        // Predicated region
        $region61: #{bert_sent_classifier_forward.1} parent=11 // pred_check
          %p536 = pneg %p354
        $region62: #{bert_sent_classifier_forward.1} parent=11 // pred_check_branch
          %538 = sbr.rel (%p536) target = $region64
        $region63: #{bert_sent_classifier_forward.1} parent=11 // pred_region
          _
        $region64: #{bert_sent_classifier_forward.1} parent=11 // pred_fallthru
          _
        // Predicated region
        $region65: #{bert_sent_classifier_forward.1} parent=11 // pred_check
          %p539 = pneg %p375
        $region66: #{bert_sent_classifier_forward.1} parent=11 // pred_check_branch
          %541 = sbr.rel (%p539) target = $region68
        $region67: #{bert_sent_classifier_forward.1} parent=11 // pred_region
          _
        $region68: #{bert_sent_classifier_forward.1} parent=11 // pred_fallthru
          _
        // Predicated region
        $region69: #{bert_sent_classifier_forward.1} parent=11 // pred_check
          %p542 = pneg %p396
        $region70: #{bert_sent_classifier_forward.1} parent=11 // pred_check_branch
          %544 = sbr.rel (%p542) target = $region72
        $region71: #{bert_sent_classifier_forward.1} parent=11 // pred_region
          _
        $region72: #{bert_sent_classifier_forward.1} parent=11 // pred_fallthru
          _
        // Predicated region
        $region73: #{bert_sent_classifier_forward.1} parent=11 // pred_check
          %p545 = pneg %p417
        $region74: #{bert_sent_classifier_forward.1} parent=11 // pred_check_branch
          %547 = sbr.rel (%p545) target = $region76
        $region75: #{bert_sent_classifier_forward.1} parent=11 // pred_region
          _
        $region76: #{bert_sent_classifier_forward.1} parent=11 // pred_fallthru
          _
        // Predicated region
        $region77: #{bert_sent_classifier_forward.1} parent=11 // pred_check
          %p548 = pneg %p438
        $region78: #{bert_sent_classifier_forward.1} parent=11 // pred_check_branch
          %550 = sbr.rel (%p548) target = $region80
        $region79: #{bert_sent_classifier_forward.1} parent=11 // pred_region
          _
        $region80: #{bert_sent_classifier_forward.1} parent=11 // pred_fallthru
          _
        // Predicated region
        $region81: #{bert_sent_classifier_forward.1} parent=11 // pred_check
          %p551 = pneg %p459
        $region82: #{bert_sent_classifier_forward.1} parent=11 // pred_check_branch
          %553 = sbr.rel (%p551) target = $region84
        $region83: #{bert_sent_classifier_forward.1} parent=11 // pred_region
          _
        $region84: #{bert_sent_classifier_forward.1} parent=11 // pred_fallthru
          _
      $region12: #{bert_sent_classifier_forward.1} parent=5 // pred_fallthru
        _
      %p554 = scmp.lt.s32.totalorder %s29, 2
      // Predicated region
      $region85: #{bert_sent_classifier_forward.1} parent=5 // pred_check
        %p555 = pneg %p554
      $region86: #{bert_sent_classifier_forward.1} parent=5 // pred_check_branch
        %557 = sbr.rel (%p555) target = $region88
      $region87: #{bert_sent_classifier_forward.1} parent=5 // pred_region
        // Predicated region
        $region89: #{bert_sent_classifier_forward.1} parent=87 // pred_check
          %p558 = pneg %p49
        $region90: #{bert_sent_classifier_forward.1} parent=87 // pred_check_branch
          %560 = sbr.rel (%p558) target = $region92
        $region91: #{bert_sent_classifier_forward.1} parent=87 // pred_region
          %p561 = scmp.lt.s32.totalorder %s29, 1
          %s562 = scalar_select %p561, %s29, 1
          %s563 = smul.addr %s562, 8
          %s564 = scalar_lea.vmem %s0, %s563
        $region92: #{bert_sent_classifier_forward.1} parent=87 // pred_fallthru
          _
        // Predicated region
        $region93: #{bert_sent_classifier_forward.1} parent=87 // pred_check
          %p565 = pneg %p159
        $region94: #{bert_sent_classifier_forward.1} parent=87 // pred_check_branch
          %567 = sbr.rel (%p565) target = $region96
        $region95: #{bert_sent_classifier_forward.1} parent=87 // pred_region
          %p568 = scmp.lt.s32.totalorder %s29, 1
          %s569 = scalar_select %p568, %s29, 1
          %s570 = scalar_lea.vmem %s5, %s569
        $region96: #{bert_sent_classifier_forward.1} parent=87 // pred_fallthru
          _
      $region88: #{bert_sent_classifier_forward.1} parent=5 // pred_fallthru
        _
      %p571 = scmp.le.s32.totalorder 1, %s29
      %p572 = scmp.lt.s32.totalorder %s29, 3
      %p573 = pnand %p571, %p572
      %p574 = pneg %p573
      // Predicated region
      $region97: #{bert_sent_classifier_forward.1} parent=5 // pred_check
        _
      $region98: #{bert_sent_classifier_forward.1} parent=5 // pred_check_branch
        %576 = sbr.rel (%p573) target = $region100
      $region99: #{bert_sent_classifier_forward.1} parent=5 // pred_region
        %s577 = ssub.s32 %s29, 1
        %p578 = scmp.lt.s32.totalorder %s34, 1
        %s579 = scalar_select %p578, %s34, 1
        %s580 = smul.addr %s579, 8
        %s581 = scalar_lea.vmem %s0, %s580
        %p582 = pneg %p55
        %p583 = pneg %p52
        %p584 = pneg %p76
        %p585 = pneg %p73
        %p586 = pneg %p97
        %p587 = pneg %p94
        %p588 = pneg %p118
        %p589 = pneg %p115
        %p590 = pneg %p139
        %p591 = pneg %p136
        %p592 = scmp.lt.s32.totalorder %s34, 1
        %s593 = scalar_select %p592, %s34, 1
        %s594 = scalar_lea.vmem %s5, %s593
        %p595 = pneg %p165
        %p596 = pneg %p162
        %p597 = pneg %p186
        %p598 = pneg %p183
        %p599 = pneg %p207
        %p600 = pneg %p204
        %p601 = pneg %p228
        %p602 = pneg %p225
        %p603 = pneg %p249
        %p604 = pneg %p246
        %p605 = pneg %p270
        %p606 = pneg %p267
        %p607 = pneg %p291
        %p608 = pneg %p288
        %p609 = pneg %p312
        %p610 = pneg %p309
        %p611 = pneg %p333
        %p612 = pneg %p330
        %p613 = pneg %p354
        %p614 = pneg %p351
        %p615 = pneg %p375
        %p616 = pneg %p372
        %p617 = pneg %p396
        %p618 = pneg %p393
        %p619 = pneg %p417
        %p620 = pneg %p414
        %p621 = pneg %p438
        %p622 = pneg %p435
        %p623 = pneg %p459
        %p624 = pneg %p456
        %p625 = pneg %p485
        %p626 = pneg %p482
        %s627 = sand.u32 %s472, 1
        %s628 = scalar_lea.sflag [#allocation3], %s627
        %s629 = sand.u32 %s472, 1
        %s630 = scalar_lea.vmem [#allocation2], %s629
        %p631 = scmp.lt.s32.totalorder %s34, 1
        %s632 = scalar_select %p631, %s34, 1
        %s633 = smul.addr %s632, 8
        %s634 = scalar_lea.vmem %s0, %s633
        %p635 = scmp.lt.s32.totalorder %s34, 1
        %s636 = scalar_select %p635, %s34, 1
        %s637 = scalar_lea.vmem %s5, %s636
        %v639 = vld [vmem:[%s634] sm:$0xff]
        %v640 = vld [vmem:[%s1] sm:$0xff]
        %v641 = vadd.f32 %v639, %v640
        %v642 = vld [vmem:[%s2] sm:$0x1]
        %v644 = vperm.slane %v642, 0
        %v646 = vadd.f32 %v641, %v644
        %v647 = vld [vmem:[%s3] sm:$0x1]
        %v648 = vld [vmem:[%s4] sm:$0x1]
        %vm649 = vcmask 261120
        %v650 = vsel %vm649, %v646, 0.0
        %651 = vadd.xlane.f32.xlu0 %v650
        %v652 = vpop.xlane.xlu0 %651
        %v653 = vrcp.pop 32.0
        %v654 = vmul.f32 32.0, %v653
        %v655 = vsub.f32 1.0, %v654
        %v656 = vmul.f32 %v653, %v655
        %v657 = vadd.f32 %v653, %v656
        %vm658 = vweird.f32 %v653
        %v659 = vsel %vm658, %v653, %v657
        %v660 = vmul.f32 %v652, %v659
        %v661 = vsub.f32 %v646, %v660
        %v662 = vmul.f32 %v661, %v661
        %v663 = vsel %vm649, %v662, 0.0
        %664 = vadd.xlane.f32.xlu0 %v663
        %v665 = vpop.xlane.xlu0 %664
        %v666 = vmul.f32 %v665, %v659
        %v667 = vadd.f32 %v666, 1e-12
        %v668 = vrsqrt.pop %v667
        %v669 = vmul.f32 %v668, %v667
        %v670 = vmul.f32 %v669, %v668
        %v671 = vmul.f32 0.5, %v670
        %v672 = vsub.f32 1.5, %v671
        %v673 = vmul.f32 %v668, %v672
        %vm674 = vweird.f32 %v667
        %vm675 = vweird.f32 %v668
        %vm676 = vmor %vm674, %vm675
        %v677 = vsel %vm676, %v668, %v673
        %v678 = vmul.f32 %v661, %v677
        %v680 = vperm.slane %v647, 0
        %v682 = vmul.f32 %v678, %v680
        %v684 = vperm.slane %v648, 0
        %v686 = vadd.f32 %v682, %v684
        %v687 = vld [vmem:[%s637] sm:$0x1]
        %v688 = vpack.c.bf16 %v686, %v686
        %v689 = vld [vmem:[%s6] sm:$0xf]
        %v690 = vld [vmem:[%s6 + $0x4] sm:$0xf]
        %v691 = vld [vmem:[%s6 + $0x8] sm:$0xf]
        %v692 = vld [vmem:[%s6 + $0xc] sm:$0xf]
        %v693 = vld [vmem:[%s7] sm:$0x1]
        %v695 = vperm.slane %v693, 0
        %v701 = vunpack.c.l.b16 %v689
        %v702 = vunpack.c.l.b16 %v690
        %v703 = vunpack.c.l.b16 %v691
        %v704 = vunpack.c.l.b16 %v692
        %v705 = vpack.c.b16 %v702, %v701
        %v706 = vpack.c.b16 %v704, %v703
        %v710 = vsel %vm649, %v688, 0
        %712 = vmatpush.bf16.msra.mxu0 0
        %713 = vmatpush.bf16.msra.mxu0 0
        %714 = vmatpush.bf16.msra.mxu0 0
        %715 = vmatpush.bf16.msra.mxu0 0
        %716 = vmatpush.bf16.msra.mxu0 0
        %717 = vmatpush.bf16.msra.mxu0 0
        %718 = vmatpush.bf16.msra.mxu0 %v706
        %719 = vmatpush.bf16.msra.mxu0 %v705
        %720 = vmatmul.bf16.gmra.mxu0 %v710
        %v721 = vpop.f32.mrf.mxu0
        %v722 = vadd.f32 %v695, %v721
        %v723 = vpop.f32.mrf.mxu0
        %724 = vdwg.mxu0
        %v725 = vpack.c.bf16 %v722, %v722
        %v727 = vperm.slane %v687, 0
        %730 = vrot.lane.b32.xlu0 %v725, 96
        %v731 = vpop.permute.xlu0 %730
        %vm732 = vcmask 130048
        %v734 = vsel %vm732, %v725, 0
        %v737 = vsel %vm732, %v731, 0
        %739 = vmatpush.bf16.xpose.msra.mxu0 0
        %740 = vmatpush.bf16.xpose.msra.mxu0 0
        %741 = vmatpush.bf16.xpose.msra.mxu0 0
        %742 = vmatpush.bf16.xpose.msra.mxu0 0
        %743 = vmatpush.bf16.xpose.msra.mxu0 0
        %744 = vmatpush.bf16.xpose.msra.mxu0 0
        %745 = vmatpush.bf16.xpose.msra.mxu0 0
        %746 = vmatpush.bf16.xpose.msra.mxu0 %v737
        %747 = vmatmul.bf16.gmra.mxu0 %v734
        %v748 = vpop.f32.mrf.mxu0
        %v749 = vadd.f32 %v727, %v748
        %v750 = vpop.f32.mrf.mxu0
        %751 = vdwg.mxu0
        %vm752 = vcmask 64512
        %v753 = vsel %vm752, %v749, -inf
        %754 = vmax.xlane.f32.xlu0 %v753
        %v755 = vpop.xlane.xlu0 %754
        %v756 = vsub.f32 %v749, %v755
        %v757 = vmul.f32 %v756, 1.442695
        %v758 = vpow.pop %v757
        %v759 = vsel %vm752, %v758, 0.0
        %760 = vadd.xlane.f32.xlu0 %v759
        %v761 = vpop.xlane.xlu0 %760
        %v762 = vrcp.pop %v761
        %v763 = vmul.f32 %v758, %v762
        %v764 = vpack.c.bf16 %v763, %v763
        %765 = vrot.lane.b32.xlu0 %v725, 64
        %v766 = vpop.permute.xlu0 %765
        %v768 = vsel %vm752, %v764, 0
        %vm770 = vcmask 1043456
        %v772 = vsel %vm770, %v766, 0
        %774 = vmatpush.bf16.msra.mxu0 0
        %775 = vmatpush.bf16.msra.mxu0 0
        %776 = vmatpush.bf16.msra.mxu0 0
        %777 = vmatpush.bf16.msra.mxu0 0
        %778 = vmatpush.bf16.msra.mxu0 0
        %779 = vmatpush.bf16.msra.mxu0 0
        %780 = vmatpush.bf16.msra.mxu0 0
        %781 = vmatpush.bf16.msra.mxu0 %v772
        %782 = vmatmul.bf16.gmra.mxu0 %v768
        %v783 = vpop.f32.mrf.mxu0
        %v784 = vadd.f32 0.0, %v783
        %v785 = vpop.f32.mrf.mxu0
        %786 = vdwg.mxu0
        %787 = vrot.lane.b32.xlu0 %v725, 112
        %v788 = vpop.permute.xlu0 %787
        %789 = vrot.lane.b32.xlu0 %v725, 80
        %v790 = vpop.permute.xlu0 %789
        %v792 = vsel %vm732, %v788, 0
        %v795 = vsel %vm732, %v790, 0
        %797 = vmatpush.bf16.xpose.msra.mxu0 0
        %798 = vmatpush.bf16.xpose.msra.mxu0 0
        %799 = vmatpush.bf16.xpose.msra.mxu0 0
        %800 = vmatpush.bf16.xpose.msra.mxu0 0
        %801 = vmatpush.bf16.xpose.msra.mxu0 0
        %802 = vmatpush.bf16.xpose.msra.mxu0 0
        %803 = vmatpush.bf16.xpose.msra.mxu0 0
        %804 = vmatpush.bf16.xpose.msra.mxu0 %v795
        %805 = vmatmul.bf16.gmra.mxu0 %v792
        %v806 = vpop.f32.mrf.mxu0
        %v807 = vadd.f32 %v727, %v806
        %v808 = vpop.f32.mrf.mxu0
        %809 = vdwg.mxu0
        %v810 = vsel %vm752, %v807, -inf
        %811 = vmax.xlane.f32.xlu0 %v810
        %v812 = vpop.xlane.xlu0 %811
        %v813 = vsub.f32 %v807, %v812
        %v814 = vmul.f32 %v813, 1.442695
        %v815 = vpow.pop %v814
        %v816 = vsel %vm752, %v815, 0.0
        %817 = vadd.xlane.f32.xlu0 %v816
        %v818 = vpop.xlane.xlu0 %817
        %v819 = vrcp.pop %v818
        %v820 = vmul.f32 %v815, %v819
        %v821 = vpack.c.bf16 %v820, %v820
        %822 = vrot.lane.b32.xlu0 %v725, 48
        %v823 = vpop.permute.xlu0 %822
        %v825 = vsel %vm752, %v821, 0
        %v828 = vsel %vm770, %v823, 0
        %830 = vmatpush.bf16.msra.mxu0 0
        %831 = vmatpush.bf16.msra.mxu0 0
        %832 = vmatpush.bf16.msra.mxu0 0
        %833 = vmatpush.bf16.msra.mxu0 0
        %834 = vmatpush.bf16.msra.mxu0 0
        %835 = vmatpush.bf16.msra.mxu0 0
        %836 = vmatpush.bf16.msra.mxu0 0
        %837 = vmatpush.bf16.msra.mxu0 %v828
        %838 = vmatmul.bf16.gmra.mxu0 %v825
        %v839 = vpop.f32.mrf.mxu0
        %v840 = vadd.f32 0.0, %v839
        %v841 = vpop.f32.mrf.mxu0
        %842 = vdwg.mxu0
        %844 = vrot.lane.b32.xlu0 %v840, 16
        %v845 = vpop.permute.xlu0 %844
        %v847 = vsel %vm732, %v784, %v845
        %v848 = vpack.c.bf16 %v847, %v847
        %v849 = vld [vmem:[%s8] sm:$0xf]
        %v850 = vld [vmem:[%s8 + $0x4] sm:$0xf]
        %v851 = vld [vmem:[%s8 + $0x8] sm:$0xf]
        %v852 = vld [vmem:[%s8 + $0xc] sm:$0xf]
        %v853 = vld [vmem:[%s9] sm:$0x1]
        %v855 = vperm.slane %v853, 0
        %v861 = vunpack.c.l.b16 %v849
        %v862 = vunpack.c.l.b16 %v850
        %v863 = vunpack.c.l.b16 %v851
        %v864 = vunpack.c.l.b16 %v852
        %v865 = vpack.c.b16 %v862, %v861
        %v866 = vpack.c.b16 %v864, %v863
        %v870 = vsel %vm649, %v848, 0
        %872 = vmatpush.bf16.msra.mxu0 0
        %873 = vmatpush.bf16.msra.mxu0 0
        %874 = vmatpush.bf16.msra.mxu0 0
        %875 = vmatpush.bf16.msra.mxu0 0
        %876 = vmatpush.bf16.msra.mxu0 0
        %877 = vmatpush.bf16.msra.mxu0 0
        %878 = vmatpush.bf16.msra.mxu0 %v866
        %879 = vmatpush.bf16.msra.mxu0 %v865
        %880 = vmatmul.bf16.gmra.mxu0 %v870
        %v881 = vpop.f32.mrf.mxu0
        %v882 = vadd.f32 %v855, %v881
        %v883 = vpop.f32.mrf.mxu0
        %884 = vdwg.mxu0
        %v885 = vadd.f32 %v882, %v686
        %v886 = vld [vmem:[%s10] sm:$0x1]
        %v887 = vld [vmem:[%s11] sm:$0x1]
        %v888 = vsel %vm649, %v885, 0.0
        %889 = vadd.xlane.f32.xlu0 %v888
        %v890 = vpop.xlane.xlu0 %889
        %v891 = vmul.f32 %v890, %v659
        %v892 = vsub.f32 %v885, %v891
        %v893 = vmul.f32 %v892, %v892
        %v894 = vsel %vm649, %v893, 0.0
        %895 = vadd.xlane.f32.xlu0 %v894
        %v896 = vpop.xlane.xlu0 %895
        %v897 = vmul.f32 %v896, %v659
        %v898 = vadd.f32 %v897, 1e-12
        %v899 = vrsqrt.pop %v898
        %v900 = vmul.f32 %v899, %v898
        %v901 = vmul.f32 %v900, %v899
        %v902 = vmul.f32 0.5, %v901
        %v903 = vsub.f32 1.5, %v902
        %v904 = vmul.f32 %v899, %v903
        %vm905 = vweird.f32 %v898
        %vm906 = vweird.f32 %v899
        %vm907 = vmor %vm905, %vm906
        %v908 = vsel %vm907, %v899, %v904
        %v909 = vmul.f32 %v892, %v908
        %v911 = vperm.slane %v886, 0
        %v913 = vmul.f32 %v909, %v911
        %v915 = vperm.slane %v887, 0
        %v917 = vadd.f32 %v913, %v915
        %v918 = vpack.c.bf16 %v917, %v917
        %v919 = vld [vmem:[%s12] sm:$0xf]
        %v920 = vld [vmem:[%s12 + $0x4] sm:$0xf]
        %v921 = vld [vmem:[%s12 + $0x8] sm:$0xf]
        %v922 = vld [vmem:[%s12 + $0xc] sm:$0xf]
        %v923 = vld [vmem:[%s13] sm:$0x1]
        %v925 = vperm.slane %v923, 0
        %v931 = vunpack.c.l.b16 %v919
        %v932 = vunpack.c.l.b16 %v920
        %v933 = vunpack.c.l.b16 %v921
        %v934 = vunpack.c.l.b16 %v922
        %v935 = vpack.c.b16 %v932, %v931
        %v936 = vpack.c.b16 %v934, %v933
        %v940 = vsel %vm649, %v918, 0
        %942 = vmatpush.bf16.msra.mxu0 0
        %943 = vmatpush.bf16.msra.mxu0 0
        %944 = vmatpush.bf16.msra.mxu0 0
        %945 = vmatpush.bf16.msra.mxu0 0
        %946 = vmatpush.bf16.msra.mxu0 0
        %947 = vmatpush.bf16.msra.mxu0 0
        %948 = vmatpush.bf16.msra.mxu0 %v936
        %949 = vmatpush.bf16.msra.mxu0 %v935
        %950 = vmatmul.bf16.gmra.mxu0 %v940
        %v951 = vpop.f32.mrf.mxu0
        %v952 = vadd.f32 %v925, %v951
        %v953 = vpop.f32.mrf.mxu0
        %954 = vdwg.mxu0
        %v955 = vmul.f32 %v952, 0.5
        %v956 = vmul.f32 %v952, %v952
        %v957 = vmul.f32 %v956, %v952
        %v958 = vmul.f32 %v957, 0.044715
        %v959 = vadd.f32 %v952, %v958
        %v960 = vmul.f32 %v959, 0.7978846
        %v961 = vtanh.pop %v960
        %v962 = vadd.f32 %v961, 1.0
        %v963 = vmul.f32 %v955, %v962
        %v964 = vpack.c.bf16 %v963, %v963
        %v965 = vld [vmem:[%s14] sm:$0xf]
        %v966 = vld [vmem:[%s14 + $0x4] sm:$0xf]
        %v967 = vld [vmem:[%s14 + $0x8] sm:$0xf]
        %v968 = vld [vmem:[%s14 + $0xc] sm:$0xf]
        %v969 = vld [vmem:[%s14 + $0x10] sm:$0xf]
        %v970 = vld [vmem:[%s14 + $0x14] sm:$0xf]
        %v971 = vld [vmem:[%s14 + $0x18] sm:$0xf]
        %v972 = vld [vmem:[%s14 + $0x1c] sm:$0xf]
        %v973 = vld [vmem:[%s15] sm:$0x1]
        %v975 = vperm.slane %v973, 0
        %v985 = vunpack.c.l.b16 %v965
        %v986 = vunpack.c.l.b16 %v966
        %v987 = vunpack.c.l.b16 %v967
        %v988 = vunpack.c.l.b16 %v968
        %v989 = vunpack.c.l.b16 %v969
        %v990 = vunpack.c.l.b16 %v970
        %v991 = vunpack.c.l.b16 %v971
        %v992 = vunpack.c.l.b16 %v972
        %v993 = vpack.c.b16 %v986, %v985
        %v994 = vpack.c.b16 %v988, %v987
        %v995 = vpack.c.b16 %v990, %v989
        %v996 = vpack.c.b16 %v992, %v991
        %vm1001 = vcmask 523264
        %v1003 = vsel %vm1001, %v964, 0
        %1005 = vmatpush.bf16.msra.mxu0 0
        %1006 = vmatpush.bf16.msra.mxu0 0
        %1007 = vmatpush.bf16.msra.mxu0 0
        %1008 = vmatpush.bf16.msra.mxu0 0
        %1009 = vmatpush.bf16.msra.mxu0 %v996
        %1010 = vmatpush.bf16.msra.mxu0 %v995
        %1011 = vmatpush.bf16.msra.mxu0 %v994
        %1012 = vmatpush.bf16.msra.mxu0 %v993
        %1013 = vmatmul.bf16.gmra.mxu0 %v1003
        %v1014 = vpop.f32.mrf.mxu0
        %v1015 = vadd.f32 %v975, %v1014
        %v1016 = vpop.f32.mrf.mxu0
        %1017 = vdwg.mxu0
        %v1018 = vadd.f32 %v1015, %v917
        %v1019 = vld [vmem:[%s16] sm:$0x1]
        %v1020 = vld [vmem:[%s17] sm:$0x1]
        %v1021 = vsel %vm649, %v1018, 0.0
        %1022 = vadd.xlane.f32.xlu0 %v1021
        %v1023 = vpop.xlane.xlu0 %1022
        %v1024 = vmul.f32 %v1023, %v659
        %v1025 = vsub.f32 %v1018, %v1024
        %v1026 = vmul.f32 %v1025, %v1025
        %v1027 = vsel %vm649, %v1026, 0.0
        %1028 = vadd.xlane.f32.xlu0 %v1027
        %v1029 = vpop.xlane.xlu0 %1028
        %v1030 = vmul.f32 %v1029, %v659
        %v1031 = vadd.f32 %v1030, 1e-12
        %v1032 = vrsqrt.pop %v1031
        %v1033 = vmul.f32 %v1032, %v1031
        %v1034 = vmul.f32 %v1033, %v1032
        %v1035 = vmul.f32 0.5, %v1034
        %v1036 = vsub.f32 1.5, %v1035
        %v1037 = vmul.f32 %v1032, %v1036
        %vm1038 = vweird.f32 %v1031
        %vm1039 = vweird.f32 %v1032
        %vm1040 = vmor %vm1038, %vm1039
        %v1041 = vsel %vm1040, %v1032, %v1037
        %v1042 = vmul.f32 %v1025, %v1041
        %v1044 = vperm.slane %v1019, 0
        %v1046 = vmul.f32 %v1042, %v1044
        %v1048 = vperm.slane %v1020, 0
        %v1050 = vadd.f32 %v1046, %v1048
        %v1051 = vpack.c.bf16 %v1050, %v1050
        %s1052 = scalar_lea.vmem %s6, 16
        %v1053 = vld [vmem:[%s1052] sm:$0xf]
        %v1054 = vld [vmem:[%s1052 + $0x4] sm:$0xf]
        %v1055 = vld [vmem:[%s1052 + $0x8] sm:$0xf]
        %v1056 = vld [vmem:[%s1052 + $0xc] sm:$0xf]
        %s1057 = scalar_lea.vmem %s7, 1
        %v1058 = vld [vmem:[%s1057] sm:$0x1]
        %v1060 = vperm.slane %v1058, 0
        %v1066 = vunpack.c.l.b16 %v1053
        %v1067 = vunpack.c.l.b16 %v1054
        %v1068 = vunpack.c.l.b16 %v1055
        %v1069 = vunpack.c.l.b16 %v1056
        %v1070 = vpack.c.b16 %v1067, %v1066
        %v1071 = vpack.c.b16 %v1069, %v1068
        %v1075 = vsel %vm649, %v1051, 0
        %1077 = vmatpush.bf16.msra.mxu0 0
        %1078 = vmatpush.bf16.msra.mxu0 0
        %1079 = vmatpush.bf16.msra.mxu0 0
        %1080 = vmatpush.bf16.msra.mxu0 0
        %1081 = vmatpush.bf16.msra.mxu0 0
        %1082 = vmatpush.bf16.msra.mxu0 0
        %1083 = vmatpush.bf16.msra.mxu0 %v1071
        %1084 = vmatpush.bf16.msra.mxu0 %v1070
        %1085 = vmatmul.bf16.gmra.mxu0 %v1075
        %v1086 = vpop.f32.mrf.mxu0
        %v1087 = vadd.f32 %v1060, %v1086
        %v1088 = vpop.f32.mrf.mxu0
        %1089 = vdwg.mxu0
        %v1090 = vpack.c.bf16 %v1087, %v1087
        %1092 = vrot.lane.b32.xlu0 %v1090, 96
        %v1093 = vpop.permute.xlu0 %1092
        %v1095 = vsel %vm732, %v1090, 0
        %v1098 = vsel %vm732, %v1093, 0
        %1100 = vmatpush.bf16.xpose.msra.mxu0 0
        %1101 = vmatpush.bf16.xpose.msra.mxu0 0
        %1102 = vmatpush.bf16.xpose.msra.mxu0 0
        %1103 = vmatpush.bf16.xpose.msra.mxu0 0
        %1104 = vmatpush.bf16.xpose.msra.mxu0 0
        %1105 = vmatpush.bf16.xpose.msra.mxu0 0
        %1106 = vmatpush.bf16.xpose.msra.mxu0 0
        %1107 = vmatpush.bf16.xpose.msra.mxu0 %v1098
        %1108 = vmatmul.bf16.gmra.mxu0 %v1095
        %v1109 = vpop.f32.mrf.mxu0
        %v1110 = vadd.f32 %v727, %v1109
        %v1111 = vpop.f32.mrf.mxu0
        %1112 = vdwg.mxu0
        %v1113 = vsel %vm752, %v1110, -inf
        %1114 = vmax.xlane.f32.xlu0 %v1113
        %v1115 = vpop.xlane.xlu0 %1114
        %v1116 = vsub.f32 %v1110, %v1115
        %v1117 = vmul.f32 %v1116, 1.442695
        %v1118 = vpow.pop %v1117
        %v1119 = vsel %vm752, %v1118, 0.0
        %1120 = vadd.xlane.f32.xlu0 %v1119
        %v1121 = vpop.xlane.xlu0 %1120
        %v1122 = vrcp.pop %v1121
        %v1123 = vmul.f32 %v1118, %v1122
        %v1124 = vpack.c.bf16 %v1123, %v1123
        %1125 = vrot.lane.b32.xlu0 %v1090, 64
        %v1126 = vpop.permute.xlu0 %1125
        %v1128 = vsel %vm752, %v1124, 0
        %v1131 = vsel %vm770, %v1126, 0
        %1133 = vmatpush.bf16.msra.mxu0 0
        %1134 = vmatpush.bf16.msra.mxu0 0
        %1135 = vmatpush.bf16.msra.mxu0 0
        %1136 = vmatpush.bf16.msra.mxu0 0
        %1137 = vmatpush.bf16.msra.mxu0 0
        %1138 = vmatpush.bf16.msra.mxu0 0
        %1139 = vmatpush.bf16.msra.mxu0 0
        %1140 = vmatpush.bf16.msra.mxu0 %v1131
        %1141 = vmatmul.bf16.gmra.mxu0 %v1128
        %v1142 = vpop.f32.mrf.mxu0
        %v1143 = vadd.f32 0.0, %v1142
        %v1144 = vpop.f32.mrf.mxu0
        %1145 = vdwg.mxu0
        %1146 = vrot.lane.b32.xlu0 %v1090, 112
        %v1147 = vpop.permute.xlu0 %1146
        %1148 = vrot.lane.b32.xlu0 %v1090, 80
        %v1149 = vpop.permute.xlu0 %1148
        %v1151 = vsel %vm732, %v1147, 0
        %v1154 = vsel %vm732, %v1149, 0
        %1156 = vmatpush.bf16.xpose.msra.mxu0 0
        %1157 = vmatpush.bf16.xpose.msra.mxu0 0
        %1158 = vmatpush.bf16.xpose.msra.mxu0 0
        %1159 = vmatpush.bf16.xpose.msra.mxu0 0
        %1160 = vmatpush.bf16.xpose.msra.mxu0 0
        %1161 = vmatpush.bf16.xpose.msra.mxu0 0
        %1162 = vmatpush.bf16.xpose.msra.mxu0 0
        %1163 = vmatpush.bf16.xpose.msra.mxu0 %v1154
        %1164 = vmatmul.bf16.gmra.mxu0 %v1151
        %v1165 = vpop.f32.mrf.mxu0
        %v1166 = vadd.f32 %v727, %v1165
        %v1167 = vpop.f32.mrf.mxu0
        %1168 = vdwg.mxu0
        %v1169 = vsel %vm752, %v1166, -inf
        %1170 = vmax.xlane.f32.xlu0 %v1169
        %v1171 = vpop.xlane.xlu0 %1170
        %v1172 = vsub.f32 %v1166, %v1171
        %v1173 = vmul.f32 %v1172, 1.442695
        %v1174 = vpow.pop %v1173
        %v1175 = vsel %vm752, %v1174, 0.0
        %1176 = vadd.xlane.f32.xlu0 %v1175
        %v1177 = vpop.xlane.xlu0 %1176
        %v1178 = vrcp.pop %v1177
        %v1179 = vmul.f32 %v1174, %v1178
        %v1180 = vpack.c.bf16 %v1179, %v1179
        %1181 = vrot.lane.b32.xlu0 %v1090, 48
        %v1182 = vpop.permute.xlu0 %1181
        %v1184 = vsel %vm752, %v1180, 0
        %v1187 = vsel %vm770, %v1182, 0
        %1189 = vmatpush.bf16.msra.mxu0 0
        %1190 = vmatpush.bf16.msra.mxu0 0
        %1191 = vmatpush.bf16.msra.mxu0 0
        %1192 = vmatpush.bf16.msra.mxu0 0
        %1193 = vmatpush.bf16.msra.mxu0 0
        %1194 = vmatpush.bf16.msra.mxu0 0
        %1195 = vmatpush.bf16.msra.mxu0 0
        %1196 = vmatpush.bf16.msra.mxu0 %v1187
        %1197 = vmatmul.bf16.gmra.mxu0 %v1184
        %v1198 = vpop.f32.mrf.mxu0
        %v1199 = vadd.f32 0.0, %v1198
        %v1200 = vpop.f32.mrf.mxu0
        %1201 = vdwg.mxu0
        %1203 = vrot.lane.b32.xlu0 %v1199, 16
        %v1204 = vpop.permute.xlu0 %1203
        %v1206 = vsel %vm732, %v1143, %v1204
        %v1207 = vpack.c.bf16 %v1206, %v1206
        %s1208 = scalar_lea.vmem %s8, 16
        %v1209 = vld [vmem:[%s1208] sm:$0xf]
        %v1210 = vld [vmem:[%s1208 + $0x4] sm:$0xf]
        %v1211 = vld [vmem:[%s1208 + $0x8] sm:$0xf]
        %v1212 = vld [vmem:[%s1208 + $0xc] sm:$0xf]
        %s1213 = scalar_lea.vmem %s9, 1
        %v1214 = vld [vmem:[%s1213] sm:$0x1]
        %v1216 = vperm.slane %v1214, 0
        %v1222 = vunpack.c.l.b16 %v1209
        %v1223 = vunpack.c.l.b16 %v1210
        %v1224 = vunpack.c.l.b16 %v1211
        %v1225 = vunpack.c.l.b16 %v1212
        %v1226 = vpack.c.b16 %v1223, %v1222
        %v1227 = vpack.c.b16 %v1225, %v1224
        %v1231 = vsel %vm649, %v1207, 0
        %1233 = vmatpush.bf16.msra.mxu0 0
        %1234 = vmatpush.bf16.msra.mxu0 0
        %1235 = vmatpush.bf16.msra.mxu0 0
        %1236 = vmatpush.bf16.msra.mxu0 0
        %1237 = vmatpush.bf16.msra.mxu0 0
        %1238 = vmatpush.bf16.msra.mxu0 0
        %1239 = vmatpush.bf16.msra.mxu0 %v1227
        %1240 = vmatpush.bf16.msra.mxu0 %v1226
        %1241 = vmatmul.bf16.gmra.mxu0 %v1231
        %v1242 = vpop.f32.mrf.mxu0
        %v1243 = vadd.f32 %v1216, %v1242
        %v1244 = vpop.f32.mrf.mxu0
        %1245 = vdwg.mxu0
        %v1246 = vadd.f32 %v1243, %v1050
        %s1247 = scalar_lea.vmem %s10, 1
        %v1248 = vld [vmem:[%s1247] sm:$0x1]
        %s1249 = scalar_lea.vmem %s11, 1
        %v1250 = vld [vmem:[%s1249] sm:$0x1]
        %v1251 = vsel %vm649, %v1246, 0.0
        %1252 = vadd.xlane.f32.xlu0 %v1251
        %v1253 = vpop.xlane.xlu0 %1252
        %v1254 = vmul.f32 %v1253, %v659
        %v1255 = vsub.f32 %v1246, %v1254
        %v1256 = vmul.f32 %v1255, %v1255
        %v1257 = vsel %vm649, %v1256, 0.0
        %1258 = vadd.xlane.f32.xlu0 %v1257
        %v1259 = vpop.xlane.xlu0 %1258
        %v1260 = vmul.f32 %v1259, %v659
        %v1261 = vadd.f32 %v1260, 1e-12
        %v1262 = vrsqrt.pop %v1261
        %v1263 = vmul.f32 %v1262, %v1261
        %v1264 = vmul.f32 %v1263, %v1262
        %v1265 = vmul.f32 0.5, %v1264
        %v1266 = vsub.f32 1.5, %v1265
        %v1267 = vmul.f32 %v1262, %v1266
        %vm1268 = vweird.f32 %v1261
        %vm1269 = vweird.f32 %v1262
        %vm1270 = vmor %vm1268, %vm1269
        %v1271 = vsel %vm1270, %v1262, %v1267
        %v1272 = vmul.f32 %v1255, %v1271
        %v1274 = vperm.slane %v1248, 0
        %v1276 = vmul.f32 %v1272, %v1274
        %v1278 = vperm.slane %v1250, 0
        %v1280 = vadd.f32 %v1276, %v1278
        %v1281 = vpack.c.bf16 %v1280, %v1280
        %s1282 = scalar_lea.vmem %s12, 16
        %v1283 = vld [vmem:[%s1282] sm:$0xf]
        %v1284 = vld [vmem:[%s1282 + $0x4] sm:$0xf]
        %v1285 = vld [vmem:[%s1282 + $0x8] sm:$0xf]
        %v1286 = vld [vmem:[%s1282 + $0xc] sm:$0xf]
        %s1287 = scalar_lea.vmem %s13, 1
        %v1288 = vld [vmem:[%s1287] sm:$0x1]
        %v1290 = vperm.slane %v1288, 0
        %v1296 = vunpack.c.l.b16 %v1283
        %v1297 = vunpack.c.l.b16 %v1284
        %v1298 = vunpack.c.l.b16 %v1285
        %v1299 = vunpack.c.l.b16 %v1286
        %v1300 = vpack.c.b16 %v1297, %v1296
        %v1301 = vpack.c.b16 %v1299, %v1298
        %v1305 = vsel %vm649, %v1281, 0
        %1307 = vmatpush.bf16.msra.mxu0 0
        %1308 = vmatpush.bf16.msra.mxu0 0
        %1309 = vmatpush.bf16.msra.mxu0 0
        %1310 = vmatpush.bf16.msra.mxu0 0
        %1311 = vmatpush.bf16.msra.mxu0 0
        %1312 = vmatpush.bf16.msra.mxu0 0
        %1313 = vmatpush.bf16.msra.mxu0 %v1301
        %1314 = vmatpush.bf16.msra.mxu0 %v1300
        %1315 = vmatmul.bf16.gmra.mxu0 %v1305
        %v1316 = vpop.f32.mrf.mxu0
        %v1317 = vadd.f32 %v1290, %v1316
        %v1318 = vpop.f32.mrf.mxu0
        %1319 = vdwg.mxu0
        %v1320 = vmul.f32 %v1317, 0.5
        %v1321 = vmul.f32 %v1317, %v1317
        %v1322 = vmul.f32 %v1321, %v1317
        %v1323 = vmul.f32 %v1322, 0.044715
        %v1324 = vadd.f32 %v1317, %v1323
        %v1325 = vmul.f32 %v1324, 0.7978846
        %v1326 = vtanh.pop %v1325
        %v1327 = vadd.f32 %v1326, 1.0
        %v1328 = vmul.f32 %v1320, %v1327
        %v1329 = vpack.c.bf16 %v1328, %v1328
        %s1330 = scalar_lea.vmem %s14, 32
        %v1331 = vld [vmem:[%s1330] sm:$0xf]
        %v1332 = vld [vmem:[%s1330 + $0x4] sm:$0xf]
        %v1333 = vld [vmem:[%s1330 + $0x8] sm:$0xf]
        %v1334 = vld [vmem:[%s1330 + $0xc] sm:$0xf]
        %v1335 = vld [vmem:[%s1330 + $0x10] sm:$0xf]
        %v1336 = vld [vmem:[%s1330 + $0x14] sm:$0xf]
        %v1337 = vld [vmem:[%s1330 + $0x18] sm:$0xf]
        %v1338 = vld [vmem:[%s1330 + $0x1c] sm:$0xf]
        %s1339 = scalar_lea.vmem %s15, 1
        %v1340 = vld [vmem:[%s1339] sm:$0x1]
        %v1342 = vperm.slane %v1340, 0
        %v1352 = vunpack.c.l.b16 %v1331
        %v1353 = vunpack.c.l.b16 %v1332
        %v1354 = vunpack.c.l.b16 %v1333
        %v1355 = vunpack.c.l.b16 %v1334
        %v1356 = vunpack.c.l.b16 %v1335
        %v1357 = vunpack.c.l.b16 %v1336
        %v1358 = vunpack.c.l.b16 %v1337
        %v1359 = vunpack.c.l.b16 %v1338
        %v1360 = vpack.c.b16 %v1353, %v1352
        %v1361 = vpack.c.b16 %v1355, %v1354
        %v1362 = vpack.c.b16 %v1357, %v1356
        %v1363 = vpack.c.b16 %v1359, %v1358
        %v1369 = vsel %vm1001, %v1329, 0
        %1371 = vmatpush.bf16.msra.mxu0 0
        %1372 = vmatpush.bf16.msra.mxu0 0
        %1373 = vmatpush.bf16.msra.mxu0 0
        %1374 = vmatpush.bf16.msra.mxu0 0
        %1375 = vmatpush.bf16.msra.mxu0 %v1363
        %1376 = vmatpush.bf16.msra.mxu0 %v1362
        %1377 = vmatpush.bf16.msra.mxu0 %v1361
        %1378 = vmatpush.bf16.msra.mxu0 %v1360
        %1379 = vmatmul.bf16.gmra.mxu0 %v1369
        %v1380 = vpop.f32.mrf.mxu0
        %v1381 = vadd.f32 %v1342, %v1380
        %v1382 = vpop.f32.mrf.mxu0
        %1383 = vdwg.mxu0
        %v1384 = vadd.f32 %v1381, %v1280
        %s1385 = scalar_lea.vmem %s16, 1
        %v1386 = vld [vmem:[%s1385] sm:$0x1]
        %s1387 = scalar_lea.vmem %s17, 1
        %v1388 = vld [vmem:[%s1387] sm:$0x1]
        %v1389 = vsel %vm649, %v1384, 0.0
        %1390 = vadd.xlane.f32.xlu0 %v1389
        %v1391 = vpop.xlane.xlu0 %1390
        %v1392 = vmul.f32 %v1391, %v659
        %v1393 = vsub.f32 %v1384, %v1392
        %v1394 = vmul.f32 %v1393, %v1393
        %v1395 = vsel %vm649, %v1394, 0.0
        %1396 = vadd.xlane.f32.xlu0 %v1395
        %v1397 = vpop.xlane.xlu0 %1396
        %v1398 = vmul.f32 %v1397, %v659
        %v1399 = vadd.f32 %v1398, 1e-12
        %v1400 = vrsqrt.pop %v1399
        %v1401 = vmul.f32 %v1400, %v1399
        %v1402 = vmul.f32 %v1401, %v1400
        %v1403 = vmul.f32 0.5, %v1402
        %v1404 = vsub.f32 1.5, %v1403
        %v1405 = vmul.f32 %v1400, %v1404
        %vm1406 = vweird.f32 %v1399
        %vm1407 = vweird.f32 %v1400
        %vm1408 = vmor %vm1406, %vm1407
        %v1409 = vsel %vm1408, %v1400, %v1405
        %v1410 = vmul.f32 %v1393, %v1409
        %v1412 = vperm.slane %v1386, 0
        %v1414 = vmul.f32 %v1410, %v1412
        %v1416 = vperm.slane %v1388, 0
        %v1418 = vadd.f32 %v1414, %v1416
        %v1419 = vpack.c.bf16 %v1418, %v1418
        %v1420 = vld [vmem:[%s18] sm:$0xf]
        %v1421 = vld [vmem:[%s18 + $0x4] sm:$0xf]
        %v1422 = vld [vmem:[%s18 + $0x8] sm:$0xf]
        %v1423 = vld [vmem:[%s18 + $0xc] sm:$0xf]
        %v1424 = vld [vmem:[%s19] sm:$0x1]
        %v1429 = vunpack.c.l.b16 %v1420
        %v1430 = vunpack.c.l.b16 %v1421
        %v1431 = vunpack.c.l.b16 %v1422
        %v1432 = vunpack.c.l.b16 %v1423
        %v1433 = vpack.c.b16 %v1430, %v1429
        %v1434 = vpack.c.b16 %v1432, %v1431
        %v1438 = vsel %vm649, %v1419, 0
        %1440 = vmatpush.bf16.msra.mxu0 0
        %1441 = vmatpush.bf16.msra.mxu0 0
        %1442 = vmatpush.bf16.msra.mxu0 0
        %1443 = vmatpush.bf16.msra.mxu0 0
        %1444 = vmatpush.bf16.msra.mxu0 0
        %1445 = vmatpush.bf16.msra.mxu0 0
        %1446 = vmatpush.bf16.msra.mxu0 %v1434
        %1447 = vmatpush.bf16.msra.mxu0 %v1433
        %1448 = vmatmul.bf16.gmra.mxu0 %v1438
        %v1449 = vpop.f32.mrf.mxu0
        %v1450 = vadd.f32 %v1424, %v1449
        %v1451 = vpop.f32.mrf.mxu0
        %1452 = vdwg.mxu0
        %1453 = vst [vmem:[%s630] sm:$0x1] %v1450
        %s1454 = sand.u32 %s472, 1
        %s1455 = scalar_lea.sflag [#allocation3], %s1454
        %s1456 = sand.u32 %s472, 1
        %s1457 = scalar_lea.vmem [#allocation2], %s1456
        // Predicated region
        $region101: #{bert_sent_classifier_forward.1} parent=99 // pred_check
          %p1458 = pneg %p482
        $region102: #{bert_sent_classifier_forward.1} parent=99 // pred_check_branch
          %1460 = sbr.rel (%p1458) target = $region104
        $region103: #{bert_sent_classifier_forward.1} parent=99 // pred_region
          %1462 = vsyncadd %s1455, 0
          %s1463 = scalar_lea.hbm %s20, %s34
          %s1465 = sshll.u32 %s1457, 4
          %s1466 = int_to_ptr.vmem [resolvable:$true] %s1465
          %s1467 = sshll.u32 %s1463, 4
          %s1468 = int_to_ptr.hbm [resolvable:$true] %s1467
          %1470 = dma.vmem_to_hbm [thread:$0]  %s1466, 16, %s1468, %s1455
        $region104: #{bert_sent_classifier_forward.1} parent=99 // pred_fallthru
          _
      $region100: #{bert_sent_classifier_forward.1} parent=5 // pred_fallthru
        _
      %p1471 = scmp.le.s32.totalorder 2, %s29
      // Predicated region
      $region105: #{bert_sent_classifier_forward.1} parent=5 // pred_check
        %p1472 = pneg %p1471
      $region106: #{bert_sent_classifier_forward.1} parent=5 // pred_check_branch
        %1474 = sbr.rel (%p1472) target = $region108
      $region107: #{bert_sent_classifier_forward.1} parent=5 // pred_region
        %s1475 = ssub.s32 %s29, 2
        // Predicated region
        $region109: #{bert_sent_classifier_forward.1} parent=107 // pred_check
          %p1476 = pneg %p488
        $region110: #{bert_sent_classifier_forward.1} parent=107 // pred_check_branch
          %1478 = sbr.rel (%p1476) target = $region112
        $region111: #{bert_sent_classifier_forward.1} parent=107 // pred_region
          %s1479 = sand.u32 %s473, 1
          %s1480 = scalar_lea.sflag [#allocation3], %s1479
          %s1481 = sand.u32 %s473, 1
          %s1482 = scalar_lea.vmem [#allocation2], %s1481
          %1484 = dma.done %s1480, 16
        $region112: #{bert_sent_classifier_forward.1} parent=107 // pred_fallthru
          _
      $region108: #{bert_sent_classifier_forward.1} parent=5 // pred_fallthru
        _
    $region6: #{bert_sent_classifier_forward.1} parent=1 // loop_footer
      %s33 = sadd.s32 1, %s29
    $region7: #{bert_sent_classifier_forward.1} parent=1 // loop_footer_branch
      %28 = sbr.rel target = $region3
    $region8: #{bert_sent_classifier_forward.1} parent=1 // loop_exit
      _
    %1485 = vsyncpa [#allocation3], 1
    %s1486 = scalar_lea.sflag [#allocation3], 1
    %1487 = vsyncpa %s1486, 1

</llo_original>
